<compile_context>
chip_gen: v7x
topology: tpu7x:2x2x1
jax: 0.10.0
libtpu: 0.0.40
codegen_flags: <defaults>
</compile_context>

<pallas_src>
import jax
import jax.numpy as jnp
from jax.experimental import pallas as pl
from jax.experimental.pallas import tpu as pltpu

BN_EPS = 1e-5


def _bn_relu(x2, gamma, beta):
    """Training-mode BatchNorm1d + ReLU on packed (M, P*C) activations.

    Each lane column is one (primitive, channel) pair, so a per-column
    reduction over M = B*N reproduces the per-primitive BN exactly.
    Two-pass (centered) variance avoids catastrophic cancellation.
    gamma/beta have shape (1, P*C).
    """
    inv_n = 1.0 / x2.shape[0]
    mean = jnp.sum(x2, axis=0, keepdims=True) * inv_n
    centered = x2 - mean
    var = jnp.sum(centered * centered, axis=0, keepdims=True) * inv_n
    scale = gamma * jax.lax.rsqrt(var + BN_EPS)
    return jnp.maximum(centered * scale + beta, 0.0)


def atlasnet_kernel(pts_ref, lat_ref,
                    w1_ref, g1_ref, be1_ref,
                    w2_ref, g2_ref, be2_ref,
                    wl_ref, gl_ref, bel_ref,
                    wlast_ref, blast_ref,
                    out_ref):
    """Single invocation: all primitives packed along the channel/lane axis."""
    n_pts = pts_ref.shape[0]            # N (points per primitive)
    batch = lat_ref.shape[0]            # B
    num_layers = wl_ref.shape[0]        # L

    # conv1: packed (N, P*dim) x block-diag (P*dim, P*C) -> (N, P*C); one MXU push,
    # output already 128-lane dense.  conv1 bias folded away (cancelled by BN).
    h = jnp.dot(pts_ref[...], w1_ref[...], preferred_element_type=jnp.float32)

    # Add the latent (tiled to (B, P*C)) and flatten batch into the matmul M axis.
    x = h[None, :, :] + lat_ref[...][:, None, :]                 # (B, N, P*C)
    x2 = x.reshape(batch * n_pts, h.shape[-1])                   # (M, P*C)
    x2 = _bn_relu(x2, g1_ref[...], be1_ref[...])

    # conv2: one (M, P*C) x (P*C, P*H) matmul shared by all primitives.
    x2 = jnp.dot(x2, w2_ref[...], preferred_element_type=jnp.float32)
    x2 = _bn_relu(x2, g2_ref[...], be2_ref[...])

    for l in range(num_layers):                                  # static unroll
        x2 = jnp.dot(x2, wl_ref[l], preferred_element_type=jnp.float32)
        x2 = _bn_relu(x2, gl_ref[l], bel_ref[l])

    # last_conv (keeps its bias; no BN follows).  Emit (P*3, M) so M = B*N stays
    # on the lane axis -> lane-dense stores over N, no in-register transpose.
    y = jnp.einsum('oc,mc->om', wlast_ref[...], x2,
                   preferred_element_type=jnp.float32)            # (P*3, M)
    y = y + blast_ref[...]                                        # bias per output row
    for b in range(batch):                                        # static, B is small
        out_ref[b] = y[:, b * n_pts:(b + 1) * n_pts].astype(out_ref.dtype)


def _block_diag(blocks):
    """blocks: (P, a, b) -> block-diagonal (P*a, P*b). Host-side packing glue."""
    P, a, b = blocks.shape
    eye = jnp.eye(P, dtype=blocks.dtype)
    return jnp.einsum('pq,pab->paqb', eye, blocks).reshape(P * a, P * b)


def atlasnet_forward(points_pdn, latent, params, num_layers):
    """points_pdn: (P, dim, N) template points (PyTorch layout, batch=1 implicit).
       latent: (B, bottleneck).  Returns (B, P, 3, N) like the PyTorch module."""
    P, dim, N = points_pdn.shape
    B, bottleneck = latent.shape
    hidden = params['w2'].shape[1]
    L = num_layers
    Cp = P * bottleneck
    Hp = P * hidden
    M = B * N

    # ---------------- host-side packing glue (tiny arrays) ----------------
    # points: (P, dim, N) -> (N, P*dim)
    pts_packed = jnp.transpose(points_pdn, (2, 0, 1)).reshape(N, P * dim)
    # latent tiled along the packed channel axis: (B, P*bottleneck)
    lat_packed = jnp.tile(latent, (1, P))
    # block-diagonal, pre-transposed weights (so the kernel contracts 'mc,cd->md')
    w1_bd = _block_diag(jnp.transpose(params['w1'], (0, 2, 1)))          # (P*dim, P*C)
    w2_bd = _block_diag(jnp.transpose(params['w2'], (0, 2, 1)))          # (P*C, P*H)
    wl_bd = jnp.stack([_block_diag(jnp.transpose(params['wl'][:, l], (0, 2, 1)))
                       for l in range(L)], axis=0)                       # (L, P*H, P*H)
    wlast_bd = _block_diag(params['wlast'])                              # (P*3, P*H)
    blast_p = params['blast'].reshape(P * 3, 1)                          # (P*3, 1)
    # BN params as packed lane rows
    g1_p = params['g1'].reshape(1, Cp)
    be1_p = params['be1'].reshape(1, Cp)
    g2_p = params['g2'].reshape(1, Hp)
    be2_p = params['be2'].reshape(1, Hp)
    gl_p = jnp.transpose(params['gl'], (1, 0, 2, 3)).reshape(L, 1, Hp)
    bel_p = jnp.transpose(params['bel'], (1, 0, 2, 3)).reshape(L, 1, Hp)
    # NOTE: conv biases b1/b2/bl are NOT passed to the kernel: a per-channel bias is
    # exactly cancelled by training-mode BatchNorm's mean subtraction.

    vmem = lambda: pl.BlockSpec(memory_space=pltpu.MemorySpace.VMEM)

    flops = int(2 * (N * (P * dim) * Cp + M * Cp * Hp + L * M * Hp * Hp
                     + (P * 3) * Hp * M) + 10 * M * Hp * (2 + L))
    bytes_accessed = int(4 * (pts_packed.size + lat_packed.size + w1_bd.size
                              + w2_bd.size + wl_bd.size + wlast_bd.size
                              + g1_p.size + be1_p.size + g2_p.size + be2_p.size
                              + gl_p.size + bel_p.size + blast_p.size
                              + B * P * 3 * N))

    out = pl.pallas_call(
        atlasnet_kernel,
        out_shape=jax.ShapeDtypeStruct((B, P * 3, N), jnp.float32),
        in_specs=[vmem() for _ in range(13)],
        out_specs=vmem(),
        cost_estimate=pl.CostEstimate(flops=flops,
                                      transcendentals=int((2 + L) * Hp),
                                      bytes_accessed=bytes_accessed),
    )(pts_packed, lat_packed,
      w1_bd, g1_p, be1_p,
      w2_bd, g2_p, be2_p,
      wl_bd, gl_p, bel_p,
      wlast_bd, blast_p)

    return out.reshape(B, P, 3, N)


# ----------------------- pure-JAX reference (PyTorch NCHW-style) -----------------------
def _bn_ncl(x, gamma, beta):
    mean = jnp.mean(x, axis=(0, 2), keepdims=True)
    var = jnp.mean(jnp.square(x - mean), axis=(0, 2), keepdims=True)
    return (x - mean) * jax.lax.rsqrt(var + BN_EPS) * gamma[None, :, None] + beta[None, :, None]


def atlasnet_ref(points_pdn, latent, params, num_layers):
    P = points_pdn.shape[0]
    lat = latent[:, :, None]
    outs = []
    for p in range(P):
        pts = points_pdn[p][None]  # (1, dim, N)
        x = jnp.einsum('oc,bcn->bon', params['w1'][p], pts) + params['b1'][p, 0][None, :, None]
        x = x + lat
        x = jnp.maximum(_bn_ncl(x, params['g1'][p, 0], params['be1'][p, 0]), 0.0)
        x = jnp.einsum('oc,bcn->bon', params['w2'][p], x) + params['b2'][p, 0][None, :, None]
        x = jnp.maximum(_bn_ncl(x, params['g2'][p, 0], params['be2'][p, 0]), 0.0)
        for i in range(num_layers):
            x = jnp.einsum('oc,bcn->bon', params['wl'][p, i], x) + params['bl'][p, i, 0][None, :, None]
            x = jnp.maximum(_bn_ncl(x, params['gl'][p, i, 0], params['bel'][p, i, 0]), 0.0)
        y = jnp.einsum('oc,bcn->bon', params['wlast'][p], x) + params['blast'][p, 0][None, :, None]
        outs.append(y[:, None])
    return jnp.concatenate(outs, axis=1)


if __name__ == "__main__":
    # opt-equivalent config (SQUARE template -> dim_template = 2)
    batch = 2
    bottleneck = 32
    hidden = 32
    nb_primitives = 4
    number_points = 512
    num_layers = 2
    dim_template = 2
    N = number_points // nb_primitives  # points per primitive (128 -> lane-dense output)

    key = jax.random.PRNGKey(0)
    keys = jax.random.split(key, 10)

    params = {
        'w1': jax.random.normal(keys[0], (nb_primitives, bottleneck, dim_template), jnp.float32) * 0.1,
        'b1': jax.random.normal(keys[1], (nb_primitives, 1, bottleneck), jnp.float32) * 0.1,
        'g1': jnp.ones((nb_primitives, 1, bottleneck), jnp.float32),
        'be1': jnp.zeros((nb_primitives, 1, bottleneck), jnp.float32),
        'w2': jax.random.normal(keys[2], (nb_primitives, hidden, bottleneck), jnp.float32) * 0.1,
        'b2': jax.random.normal(keys[3], (nb_primitives, 1, hidden), jnp.float32) * 0.1,
        'g2': jnp.ones((nb_primitives, 1, hidden), jnp.float32),
        'be2': jnp.zeros((nb_primitives, 1, hidden), jnp.float32),
        'wl': jax.random.normal(keys[4], (nb_primitives, num_layers, hidden, hidden), jnp.float32) * 0.1,
        'bl': jax.random.normal(keys[5], (nb_primitives, num_layers, 1, hidden), jnp.float32) * 0.1,
        'gl': jnp.ones((nb_primitives, num_layers, 1, hidden), jnp.float32),
        'bel': jnp.zeros((nb_primitives, num_layers, 1, hidden), jnp.float32),
        'wlast': jax.random.normal(keys[6], (nb_primitives, 3, hidden), jnp.float32) * 0.1,
        'blast': jax.random.normal(keys[7], (nb_primitives, 1, 3), jnp.float32) * 0.1,
    }

    latent_vector = jax.random.normal(keys[8], (batch, bottleneck), jnp.float32)
    # train=True: random uniform points on the unit square, one set per primitive
    # TODO(synk): template random-point sampling is host-side glue, not in-kernel.
    points_pdn = jax.random.uniform(keys[9], (nb_primitives, dim_template, N), dtype=jnp.float32)

    out = atlasnet_forward(points_pdn, latent_vector, params, num_layers)
    out = jax.block_until_ready(out)

    ref = atlasnet_ref(points_pdn, latent_vector, params, num_layers)
    assert out.shape == (batch, nb_primitives, 3, N), out.shape
    max_err = float(jnp.max(jnp.abs(out - ref)))
    assert jnp.allclose(out, ref, rtol=1e-3, atol=2e-4), max_err
    print("KERNEL_OK")
</pallas_src>

<mosaic_0001>
module attributes {stable_mosaic.version = 11 : i64} {
  func.func @atlasnet_kernel(%arg0: memref<128x8xf32, #tpu.memory_space<vmem>>, %arg1: memref<2x128xf32, #tpu.memory_space<vmem>>, %arg2: memref<8x128xf32, #tpu.memory_space<vmem>>, %arg3: memref<1x128xf32, #tpu.memory_space<vmem>>, %arg4: memref<1x128xf32, #tpu.memory_space<vmem>>, %arg5: memref<128x128xf32, #tpu.memory_space<vmem>>, %arg6: memref<1x128xf32, #tpu.memory_space<vmem>>, %arg7: memref<1x128xf32, #tpu.memory_space<vmem>>, %arg8: memref<2x128x128xf32, #tpu.memory_space<vmem>>, %arg9: memref<2x1x128xf32, #tpu.memory_space<vmem>>, %arg10: memref<2x1x128xf32, #tpu.memory_space<vmem>>, %arg11: memref<12x128xf32, #tpu.memory_space<vmem>>, %arg12: memref<12x1xf32, #tpu.memory_space<vmem>>, %arg13: memref<2x12x128xf32, #tpu.memory_space<vmem>>) attributes {dimension_semantics = [], scalar_prefetch = 0 : i64, scratch_operands = 0 : i64, tpu.core_type = #tpu.core_type<tc>} {
    %c0 = arith.constant 0 : index
    %c0_0 = arith.constant 0 : index
    %0 = vector.load %arg0[%c0, %c0_0] : memref<128x8xf32, #tpu.memory_space<vmem>>, vector<128x8xf32>
    %c0_1 = arith.constant 0 : index
    %c0_2 = arith.constant 0 : index
    %1 = vector.load %arg2[%c0_1, %c0_2] : memref<8x128xf32, #tpu.memory_space<vmem>>, vector<8x128xf32>
    %cst = arith.constant dense<0.000000e+00> : vector<128x128xf32>
    %2 = tpu.matmul %0, %1, %cst {dimension_numbers = #tpu.dot_dimension_numbers<[1], [0], [0], [1], [0, 0, 1, 1], [], []>} : vector<128x8xf32>, vector<8x128xf32>, vector<128x128xf32> -> vector<128x128xf32>
    %3 = vector.shape_cast %2 : vector<128x128xf32> to vector<1x128x128xf32>
    %c0_3 = arith.constant 0 : index
    %c0_4 = arith.constant 0 : index
    %4 = vector.load %arg1[%c0_3, %c0_4] : memref<2x128xf32, #tpu.memory_space<vmem>>, vector<2x128xf32>
    %5 = vector.shape_cast %4 : vector<2x128xf32> to vector<2x1x128xf32>
    %6 = vector.broadcast %3 : vector<1x128x128xf32> to vector<2x128x128xf32>
    %7 = vector.broadcast %5 : vector<2x1x128xf32> to vector<2x128x128xf32>
    %8 = arith.addf %6, %7 : vector<2x128x128xf32>
    %9 = vector.shape_cast %8 : vector<2x128x128xf32> to vector<256x128xf32>
    %c0_5 = arith.constant 0 : index
    %c0_6 = arith.constant 0 : index
    %10 = vector.load %arg3[%c0_5, %c0_6] : memref<1x128xf32, #tpu.memory_space<vmem>>, vector<1x128xf32>
    %c0_7 = arith.constant 0 : index
    %c0_8 = arith.constant 0 : index
    %11 = vector.load %arg4[%c0_7, %c0_8] : memref<1x128xf32, #tpu.memory_space<vmem>>, vector<1x128xf32>
    %cst_9 = arith.constant dense<0.000000e+00> : vector<128xf32>
    %12 = vector.multi_reduction <add>, %9, %cst_9 [0] : vector<256x128xf32> to vector<128xf32>
    %13 = vector.shape_cast %12 : vector<128xf32> to vector<1x128xf32>
    %cst_10 = arith.constant 3.906250e-03 : f32
    %14 = vector.broadcast %cst_10 : f32 to vector<1x128xf32>
    %15 = arith.mulf %13, %14 : vector<1x128xf32>
    %16 = vector.broadcast %15 : vector<1x128xf32> to vector<256x128xf32>
    %17 = arith.subf %9, %16 : vector<256x128xf32>
    %18 = arith.mulf %17, %17 : vector<256x128xf32>
    %cst_11 = arith.constant dense<0.000000e+00> : vector<128xf32>
    %19 = vector.multi_reduction <add>, %18, %cst_11 [0] : vector<256x128xf32> to vector<128xf32>
    %20 = vector.shape_cast %19 : vector<128xf32> to vector<1x128xf32>
    %cst_12 = arith.constant 3.906250e-03 : f32
    %21 = vector.broadcast %cst_12 : f32 to vector<1x128xf32>
    %22 = arith.mulf %20, %21 : vector<1x128xf32>
    %cst_13 = arith.constant 9.99999974E-6 : f32
    %23 = vector.broadcast %cst_13 : f32 to vector<1x128xf32>
    %24 = arith.addf %22, %23 : vector<1x128xf32>
    %25 = math.rsqrt %24 : vector<1x128xf32>
    %26 = arith.mulf %10, %25 : vector<1x128xf32>
    %27 = vector.broadcast %26 : vector<1x128xf32> to vector<256x128xf32>
    %28 = arith.mulf %17, %27 : vector<256x128xf32>
    %29 = vector.broadcast %11 : vector<1x128xf32> to vector<256x128xf32>
    %30 = arith.addf %28, %29 : vector<256x128xf32>
    %cst_14 = arith.constant 0.000000e+00 : f32
    %31 = vector.broadcast %cst_14 : f32 to vector<256x128xf32>
    %32 = arith.maximumf %30, %31 : vector<256x128xf32>
    %c0_15 = arith.constant 0 : index
    %c0_16 = arith.constant 0 : index
    %33 = vector.load %arg5[%c0_15, %c0_16] : memref<128x128xf32, #tpu.memory_space<vmem>>, vector<128x128xf32>
    %cst_17 = arith.constant dense<0.000000e+00> : vector<256x128xf32>
    %34 = tpu.matmul %32, %33, %cst_17 {dimension_numbers = #tpu.dot_dimension_numbers<[1], [0], [0], [1], [0, 0, 1, 1], [], []>} : vector<256x128xf32>, vector<128x128xf32>, vector<256x128xf32> -> vector<256x128xf32>
    %c0_18 = arith.constant 0 : index
    %c0_19 = arith.constant 0 : index
    %35 = vector.load %arg6[%c0_18, %c0_19] : memref<1x128xf32, #tpu.memory_space<vmem>>, vector<1x128xf32>
    %c0_20 = arith.constant 0 : index
    %c0_21 = arith.constant 0 : index
    %36 = vector.load %arg7[%c0_20, %c0_21] : memref<1x128xf32, #tpu.memory_space<vmem>>, vector<1x128xf32>
    %cst_22 = arith.constant dense<0.000000e+00> : vector<128xf32>
    %37 = vector.multi_reduction <add>, %34, %cst_22 [0] : vector<256x128xf32> to vector<128xf32>
    %38 = vector.shape_cast %37 : vector<128xf32> to vector<1x128xf32>
    %cst_23 = arith.constant 3.906250e-03 : f32
    %39 = vector.broadcast %cst_23 : f32 to vector<1x128xf32>
    %40 = arith.mulf %38, %39 : vector<1x128xf32>
    %41 = vector.broadcast %40 : vector<1x128xf32> to vector<256x128xf32>
    %42 = arith.subf %34, %41 : vector<256x128xf32>
    %43 = arith.mulf %42, %42 : vector<256x128xf32>
    %cst_24 = arith.constant dense<0.000000e+00> : vector<128xf32>
    %44 = vector.multi_reduction <add>, %43, %cst_24 [0] : vector<256x128xf32> to vector<128xf32>
    %45 = vector.shape_cast %44 : vector<128xf32> to vector<1x128xf32>
    %cst_25 = arith.constant 3.906250e-03 : f32
    %46 = vector.broadcast %cst_25 : f32 to vector<1x128xf32>
    %47 = arith.mulf %45, %46 : vector<1x128xf32>
    %cst_26 = arith.constant 9.99999974E-6 : f32
    %48 = vector.broadcast %cst_26 : f32 to vector<1x128xf32>
    %49 = arith.addf %47, %48 : vector<1x128xf32>
    %50 = math.rsqrt %49 : vector<1x128xf32>
    %51 = arith.mulf %35, %50 : vector<1x128xf32>
    %52 = vector.broadcast %51 : vector<1x128xf32> to vector<256x128xf32>
    %53 = arith.mulf %42, %52 : vector<256x128xf32>
    %54 = vector.broadcast %36 : vector<1x128xf32> to vector<256x128xf32>
    %55 = arith.addf %53, %54 : vector<256x128xf32>
    %cst_27 = arith.constant 0.000000e+00 : f32
    %56 = vector.broadcast %cst_27 : f32 to vector<256x128xf32>
    %57 = arith.maximumf %55, %56 : vector<256x128xf32>
    %c0_28 = arith.constant 0 : index
    %c0_29 = arith.constant 0 : index
    %c0_30 = arith.constant 0 : index
    %58 = vector.load %arg8[%c0_28, %c0_29, %c0_30] : memref<2x128x128xf32, #tpu.memory_space<vmem>>, vector<1x128x128xf32>
    %59 = vector.shape_cast %58 : vector<1x128x128xf32> to vector<128x128xf32>
    %cst_31 = arith.constant dense<0.000000e+00> : vector<256x128xf32>
    %60 = tpu.matmul %57, %59, %cst_31 {dimension_numbers = #tpu.dot_dimension_numbers<[1], [0], [0], [1], [0, 0, 1, 1], [], []>} : vector<256x128xf32>, vector<128x128xf32>, vector<256x128xf32> -> vector<256x128xf32>
    %c0_32 = arith.constant 0 : index
    %c0_33 = arith.constant 0 : index
    %c0_34 = arith.constant 0 : index
    %61 = vector.load %arg9[%c0_32, %c0_33, %c0_34] : memref<2x1x128xf32, #tpu.memory_space<vmem>>, vector<1x1x128xf32>
    %62 = vector.shape_cast %61 : vector<1x1x128xf32> to vector<1x128xf32>
    %c0_35 = arith.constant 0 : index
    %c0_36 = arith.constant 0 : index
    %c0_37 = arith.constant 0 : index
    %63 = vector.load %arg10[%c0_35, %c0_36, %c0_37] : memref<2x1x128xf32, #tpu.memory_space<vmem>>, vector<1x1x128xf32>
    %64 = vector.shape_cast %63 : vector<1x1x128xf32> to vector<1x128xf32>
    %cst_38 = arith.constant dense<0.000000e+00> : vector<128xf32>
    %65 = vector.multi_reduction <add>, %60, %cst_38 [0] : vector<256x128xf32> to vector<128xf32>
    %66 = vector.shape_cast %65 : vector<128xf32> to vector<1x128xf32>
    %cst_39 = arith.constant 3.906250e-03 : f32
    %67 = vector.broadcast %cst_39 : f32 to vector<1x128xf32>
    %68 = arith.mulf %66, %67 : vector<1x128xf32>
    %69 = vector.broadcast %68 : vector<1x128xf32> to vector<256x128xf32>
    %70 = arith.subf %60, %69 : vector<256x128xf32>
    %71 = arith.mulf %70, %70 : vector<256x128xf32>
    %cst_40 = arith.constant dense<0.000000e+00> : vector<128xf32>
    %72 = vector.multi_reduction <add>, %71, %cst_40 [0] : vector<256x128xf32> to vector<128xf32>
    %73 = vector.shape_cast %72 : vector<128xf32> to vector<1x128xf32>
    %cst_41 = arith.constant 3.906250e-03 : f32
    %74 = vector.broadcast %cst_41 : f32 to vector<1x128xf32>
    %75 = arith.mulf %73, %74 : vector<1x128xf32>
    %cst_42 = arith.constant 9.99999974E-6 : f32
    %76 = vector.broadcast %cst_42 : f32 to vector<1x128xf32>
    %77 = arith.addf %75, %76 : vector<1x128xf32>
    %78 = math.rsqrt %77 : vector<1x128xf32>
    %79 = arith.mulf %62, %78 : vector<1x128xf32>
    %80 = vector.broadcast %79 : vector<1x128xf32> to vector<256x128xf32>
    %81 = arith.mulf %70, %80 : vector<256x128xf32>
    %82 = vector.broadcast %64 : vector<1x128xf32> to vector<256x128xf32>
    %83 = arith.addf %81, %82 : vector<256x128xf32>
    %cst_43 = arith.constant 0.000000e+00 : f32
    %84 = vector.broadcast %cst_43 : f32 to vector<256x128xf32>
    %85 = arith.maximumf %83, %84 : vector<256x128xf32>
    %c1 = arith.constant 1 : index
    %c0_44 = arith.constant 0 : index
    %c0_45 = arith.constant 0 : index
    %86 = vector.load %arg8[%c1, %c0_44, %c0_45] : memref<2x128x128xf32, #tpu.memory_space<vmem>>, vector<1x128x128xf32>
    %87 = vector.shape_cast %86 : vector<1x128x128xf32> to vector<128x128xf32>
    %cst_46 = arith.constant dense<0.000000e+00> : vector<256x128xf32>
    %88 = tpu.matmul %85, %87, %cst_46 {dimension_numbers = #tpu.dot_dimension_numbers<[1], [0], [0], [1], [0, 0, 1, 1], [], []>} : vector<256x128xf32>, vector<128x128xf32>, vector<256x128xf32> -> vector<256x128xf32>
    %c1_47 = arith.constant 1 : index
    %c0_48 = arith.constant 0 : index
    %c0_49 = arith.constant 0 : index
    %89 = vector.load %arg9[%c1_47, %c0_48, %c0_49] : memref<2x1x128xf32, #tpu.memory_space<vmem>>, vector<1x1x128xf32>
    %90 = vector.shape_cast %89 : vector<1x1x128xf32> to vector<1x128xf32>
    %c1_50 = arith.constant 1 : index
    %c0_51 = arith.constant 0 : index
    %c0_52 = arith.constant 0 : index
    %91 = vector.load %arg10[%c1_50, %c0_51, %c0_52] : memref<2x1x128xf32, #tpu.memory_space<vmem>>, vector<1x1x128xf32>
    %92 = vector.shape_cast %91 : vector<1x1x128xf32> to vector<1x128xf32>
    %cst_53 = arith.constant dense<0.000000e+00> : vector<128xf32>
    %93 = vector.multi_reduction <add>, %88, %cst_53 [0] : vector<256x128xf32> to vector<128xf32>
    %94 = vector.shape_cast %93 : vector<128xf32> to vector<1x128xf32>
    %cst_54 = arith.constant 3.906250e-03 : f32
    %95 = vector.broadcast %cst_54 : f32 to vector<1x128xf32>
    %96 = arith.mulf %94, %95 : vector<1x128xf32>
    %97 = vector.broadcast %96 : vector<1x128xf32> to vector<256x128xf32>
    %98 = arith.subf %88, %97 : vector<256x128xf32>
    %99 = arith.mulf %98, %98 : vector<256x128xf32>
    %cst_55 = arith.constant dense<0.000000e+00> : vector<128xf32>
    %100 = vector.multi_reduction <add>, %99, %cst_55 [0] : vector<256x128xf32> to vector<128xf32>
    %101 = vector.shape_cast %100 : vector<128xf32> to vector<1x128xf32>
    %cst_56 = arith.constant 3.906250e-03 : f32
    %102 = vector.broadcast %cst_56 : f32 to vector<1x128xf32>
    %103 = arith.mulf %101, %102 : vector<1x128xf32>
    %cst_57 = arith.constant 9.99999974E-6 : f32
    %104 = vector.broadcast %cst_57 : f32 to vector<1x128xf32>
    %105 = arith.addf %103, %104 : vector<1x128xf32>
    %106 = math.rsqrt %105 : vector<1x128xf32>
    %107 = arith.mulf %90, %106 : vector<1x128xf32>
    %108 = vector.broadcast %107 : vector<1x128xf32> to vector<256x128xf32>
    %109 = arith.mulf %98, %108 : vector<256x128xf32>
    %110 = vector.broadcast %92 : vector<1x128xf32> to vector<256x128xf32>
    %111 = arith.addf %109, %110 : vector<256x128xf32>
    %cst_58 = arith.constant 0.000000e+00 : f32
    %112 = vector.broadcast %cst_58 : f32 to vector<256x128xf32>
    %113 = arith.maximumf %111, %112 : vector<256x128xf32>
    %c0_59 = arith.constant 0 : index
    %c0_60 = arith.constant 0 : index
    %114 = vector.load %arg11[%c0_59, %c0_60] : memref<12x128xf32, #tpu.memory_space<vmem>>, vector<12x128xf32>
    "tpu.trace_start"() <{level = 10 : i32, message = "oc,mc->om"}> : () -> ()
    %cst_61 = arith.constant dense<0.000000e+00> : vector<12x256xf32>
    %115 = tpu.matmul %114, %113, %cst_61 {dimension_numbers = #tpu.dot_dimension_numbers<[1], [1], [0], [0], [0, 0, 1, 0], [], []>} : vector<12x128xf32>, vector<256x128xf32>, vector<12x256xf32> -> vector<12x256xf32>
    "tpu.trace_stop"() : () -> ()
    %c0_62 = arith.constant 0 : index
    %c0_63 = arith.constant 0 : index
    %116 = vector.load %arg12[%c0_62, %c0_63] : memref<12x1xf32, #tpu.memory_space<vmem>>, vector<12x1xf32>
    %117 = vector.broadcast %116 : vector<12x1xf32> to vector<12x256xf32>
    %118 = arith.addf %115, %117 : vector<12x256xf32>
    %119 = vector.extract_strided_slice %118 {offsets = [0, 0], sizes = [12, 128], strides = [1, 1]} : vector<12x256xf32> to vector<12x128xf32>
    %c0_64 = arith.constant 0 : index
    %c0_65 = arith.constant 0 : index
    %c0_66 = arith.constant 0 : index
    %120 = vector.load %arg13[%c0_64, %c0_65, %c0_66] : memref<2x12x128xf32, #tpu.memory_space<vmem>>, vector<1x12x128xf32>
    %121 = vector.shape_cast %120 : vector<1x12x128xf32> to vector<12x128xf32>
    %122 = vector.shape_cast %119 : vector<12x128xf32> to vector<1x12x128xf32>
    tpu.vector_store %arg13[%c0_64, %c0_65, %c0_66], %122 {strides = array<i32>} : memref<2x12x128xf32, #tpu.memory_space<vmem>>, vector<1x12x128xf32>,
    %123 = vector.extract_strided_slice %118 {offsets = [0, 128], sizes = [12, 128], strides = [1, 1]} : vector<12x256xf32> to vector<12x128xf32>
    %c1_67 = arith.constant 1 : index
    %c0_68 = arith.constant 0 : index
    %c0_69 = arith.constant 0 : index
    %124 = vector.load %arg13[%c1_67, %c0_68, %c0_69] : memref<2x12x128xf32, #tpu.memory_space<vmem>>, vector<1x12x128xf32>
    %125 = vector.shape_cast %124 : vector<1x12x128xf32> to vector<12x128xf32>
    %126 = vector.shape_cast %123 : vector<12x128xf32> to vector<1x12x128xf32>
    tpu.vector_store %arg13[%c1_67, %c0_68, %c0_69], %126 {strides = array<i32>} : memref<2x12x128xf32, #tpu.memory_space<vmem>>, vector<1x12x128xf32>,
    return
  }
}

</mosaic_0001>

<llo_original>
// kernel: tpu_custom_call.1
$region0: #{tpu_custom_call.1}
  #allocation0 [shape = 'u32[]', space=smem, size = 0x4, offset = 0x4, fixed_abs, tag = 'smem constant byte address 0x4 - core index']
  #allocation1 [shape = 'u32[144,128]{1,0:T(1,128)}', space=vmem, size = 0x12000, scoped, tag = 'internal scratch']
  %s0 = inlined_call_operand.vmem [shape: f32[128,8], index: 0, kind: input, shape index: {}]
  %s1 = inlined_call_operand.vmem [shape: f32[2,128], index: 1, kind: input, shape index: {}]
  %s2 = inlined_call_operand.vmem [shape: f32[8,128], index: 2, kind: input, shape index: {}]
  %s3 = inlined_call_operand.vmem [shape: f32[1,128], index: 3, kind: input, shape index: {}]
  %s4 = inlined_call_operand.vmem [shape: f32[1,128], index: 4, kind: input, shape index: {}]
  %s5 = inlined_call_operand.vmem [shape: f32[128,128], index: 5, kind: input, shape index: {}]
  %s6 = inlined_call_operand.vmem [shape: f32[1,128], index: 6, kind: input, shape index: {}]
  %s7 = inlined_call_operand.vmem [shape: f32[1,128], index: 7, kind: input, shape index: {}]
  %s8 = inlined_call_operand.hbm [shape: f32[2,128,128], index: 8, kind: input, shape index: {}]
  %s9 = inlined_call_operand.vmem [shape: f32[2,1,128], index: 9, kind: input, shape index: {}]
  %s10 = inlined_call_operand.vmem [shape: f32[2,1,128], index: 10, kind: input, shape index: {}]
  %s11 = inlined_call_operand.vmem [shape: f32[12,128], index: 11, kind: input, shape index: {}]
  %s12 = inlined_call_operand.vmem [shape: f32[12,1], index: 12, kind: input, shape index: {}]
  %s13 = inlined_call_operand.vmem [shape: f32[2,12,128], index: 13, kind: output, shape index: {}]
  %s14 = sld [smem:[#allocation0]]
  $region66: #{tpu_custom_call.1} parent=0
    _
  %s16 = ssub.s32 1, %s14
  %s17 = scalar_select 0, %s16, %s14
  $region1: #{tpu_custom_call.1} parent=0
    #allocation2 [shape = 'u8[131072]{0}', space=vmem, size = 0x20000, scoped, tag = 'input window, operand 8, single buffered']
    #allocation3 [shape = 's32[1]{0}', space=sflag, size = 0x4, scoped, tag = 'scoped memory for tpu_custom_call.1']
    %18 = vsyncpa [#allocation3], 0
    // Predicated region
    $region2: #{tpu_custom_call.1} parent=1 // pred_check
      _
    $region3: #{tpu_custom_call.1} parent=1 // pred_check_branch
      %20 = sbr.rel (0) target = $region5
    $region4: #{tpu_custom_call.1} parent=1 // pred_region
      _
    $region5: #{tpu_custom_call.1} parent=1 // pred_fallthru
      _
    // Predicated region
    $region6: #{tpu_custom_call.1} parent=1 // pred_check
      _
    $region7: #{tpu_custom_call.1} parent=1 // pred_check_branch
      %22 = sbr.rel (0) target = $region9
    $region8: #{tpu_custom_call.1} parent=1 // pred_region
      _
    $region9: #{tpu_custom_call.1} parent=1 // pred_fallthru
      _
    // Predicated region
    $region10: #{tpu_custom_call.1} parent=1 // pred_check
      _
    $region11: #{tpu_custom_call.1} parent=1 // pred_check_branch
      %24 = sbr.rel (0) target = $region13
    $region12: #{tpu_custom_call.1} parent=1 // pred_region
      _
    $region13: #{tpu_custom_call.1} parent=1 // pred_fallthru
      _
    // Predicated region
    $region14: #{tpu_custom_call.1} parent=1 // pred_check
      _
    $region15: #{tpu_custom_call.1} parent=1 // pred_check_branch
      %26 = sbr.rel (0) target = $region17
    $region16: #{tpu_custom_call.1} parent=1 // pred_region
      _
    $region17: #{tpu_custom_call.1} parent=1 // pred_fallthru
      _
    // Predicated region
    $region18: #{tpu_custom_call.1} parent=1 // pred_check
      _
    $region19: #{tpu_custom_call.1} parent=1 // pred_check_branch
      %28 = sbr.rel (0) target = $region21
    $region20: #{tpu_custom_call.1} parent=1 // pred_region
      _
    $region21: #{tpu_custom_call.1} parent=1 // pred_fallthru
      _
    // Predicated region
    $region22: #{tpu_custom_call.1} parent=1 // pred_check
      _
    $region23: #{tpu_custom_call.1} parent=1 // pred_check_branch
      %30 = sbr.rel (0) target = $region25
    $region24: #{tpu_custom_call.1} parent=1 // pred_region
      _
    $region25: #{tpu_custom_call.1} parent=1 // pred_fallthru
      _
    // Predicated region
    $region26: #{tpu_custom_call.1} parent=1 // pred_check
      _
    $region27: #{tpu_custom_call.1} parent=1 // pred_check_branch
      %32 = sbr.rel (0) target = $region29
    $region28: #{tpu_custom_call.1} parent=1 // pred_region
      _
    $region29: #{tpu_custom_call.1} parent=1 // pred_fallthru
      _
    // Predicated region
    $region30: #{tpu_custom_call.1} parent=1 // pred_check
      _
    $region31: #{tpu_custom_call.1} parent=1 // pred_check_branch
      %34 = sbr.rel (0) target = $region33
    $region32: #{tpu_custom_call.1} parent=1 // pred_region
      _
    $region33: #{tpu_custom_call.1} parent=1 // pred_fallthru
      _
    // Predicated region
    $region34: #{tpu_custom_call.1} parent=1 // pred_check
      _
    $region35: #{tpu_custom_call.1} parent=1 // pred_check_branch
      %36 = sbr.rel (0) target = $region37
    $region36: #{tpu_custom_call.1} parent=1 // pred_region
      %s38 = ssub.s32 4096, 4096
      %39 = vsyncadd [#allocation3], %s38
      %s40 = sshll.u32 [#allocation2], 4
      %s41 = int_to_ptr.vmem [resolvable:$true] %s40
      %46 = dma.hbm_to_vmem [thread:$0]  %s8, 4096, %s41, [#allocation3], 128, 128, 8
    $region37: #{tpu_custom_call.1} parent=1 // pred_fallthru
      _
    // Predicated region
    $region38: #{tpu_custom_call.1} parent=1 // pred_check
      _
    $region39: #{tpu_custom_call.1} parent=1 // pred_check_branch
      %48 = sbr.rel (0) target = $region41
    $region40: #{tpu_custom_call.1} parent=1 // pred_region
      _
    $region41: #{tpu_custom_call.1} parent=1 // pred_fallthru
      _
    // Predicated region
    $region42: #{tpu_custom_call.1} parent=1 // pred_check
      _
    $region43: #{tpu_custom_call.1} parent=1 // pred_check_branch
      %50 = sbr.rel (0) target = $region45
    $region44: #{tpu_custom_call.1} parent=1 // pred_region
      _
    $region45: #{tpu_custom_call.1} parent=1 // pred_fallthru
      _
    // Predicated region
    $region46: #{tpu_custom_call.1} parent=1 // pred_check
      _
    $region47: #{tpu_custom_call.1} parent=1 // pred_check_branch
      %52 = sbr.rel (0) target = $region49
    $region48: #{tpu_custom_call.1} parent=1 // pred_region
      _
    $region49: #{tpu_custom_call.1} parent=1 // pred_fallthru
      _
    // Predicated region
    $region50: #{tpu_custom_call.1} parent=1 // pred_check
      _
    $region51: #{tpu_custom_call.1} parent=1 // pred_check_branch
      %54 = sbr.rel (0) target = $region53
    $region52: #{tpu_custom_call.1} parent=1 // pred_region
      _
    $region53: #{tpu_custom_call.1} parent=1 // pred_fallthru
      _
    // Predicated region
    $region54: #{tpu_custom_call.1} parent=1 // pred_check
      _
    $region55: #{tpu_custom_call.1} parent=1 // pred_check_branch
      %56 = sbr.rel (0) target = $region57
    $region56: #{tpu_custom_call.1} parent=1 // pred_region
      %57 = dma.done [#allocation3], 4096
    $region57: #{tpu_custom_call.1} parent=1 // pred_fallthru
      _
    %v58 = vld [vmem:[%s0] sm:$0xff]
    %v59 = vld [vmem:[%s0 + $0x8] sm:$0xff]
    %v60 = vld [vmem:[%s0 + $0x10] sm:$0xff]
    %v61 = vld [vmem:[%s0 + $0x18] sm:$0xff]
    %v62 = vld [vmem:[%s0 + $0x20] sm:$0xff]
    %v63 = vld [vmem:[%s0 + $0x28] sm:$0xff]
    %v64 = vld [vmem:[%s0 + $0x30] sm:$0xff]
    %v65 = vld [vmem:[%s0 + $0x38] sm:$0xff]
    %v66 = vld [vmem:[%s0 + $0x40] sm:$0xff]
    %v67 = vld [vmem:[%s0 + $0x48] sm:$0xff]
    %v68 = vld [vmem:[%s0 + $0x50] sm:$0xff]
    %v69 = vld [vmem:[%s0 + $0x58] sm:$0xff]
    %v70 = vld [vmem:[%s0 + $0x60] sm:$0xff]
    %v71 = vld [vmem:[%s0 + $0x68] sm:$0xff]
    %v72 = vld [vmem:[%s0 + $0x70] sm:$0xff]
    %v73 = vld [vmem:[%s0 + $0x78] sm:$0xff]
    %v74 = vld [vmem:[%s2] sm:$0xff]
    %vm75 = vcmask 64512
    %v77 = vsel %vm75, %v58, 0
    %v80 = vsel %vm75, %v59, 0
    %v83 = vsel %vm75, %v60, 0
    %v86 = vsel %vm75, %v61, 0
    %v89 = vsel %vm75, %v62, 0
    %v92 = vsel %vm75, %v63, 0
    %v95 = vsel %vm75, %v64, 0
    %v98 = vsel %vm75, %v65, 0
    %v101 = vsel %vm75, %v66, 0
    %v104 = vsel %vm75, %v67, 0
    %v107 = vsel %vm75, %v68, 0
    %v110 = vsel %vm75, %v69, 0
    %v113 = vsel %vm75, %v70, 0
    %v116 = vsel %vm75, %v71, 0
    %v119 = vsel %vm75, %v72, 0
    %v122 = vsel %vm75, %v73, 0
    %124 = vmatprep.subr.mxu0 0.0
    %125 = vmatpush1.msra.mxu0 %v74
    %126 = vmatprep.subr.mxu0 0.0
    %127 = vmatpush1.msra.mxu0 0.0
    %128 = vmatprep.subr.mxu0 0.0
    %129 = vmatpush1.msra.mxu0 0.0
    %130 = vmatprep.subr.mxu0 0.0
    %131 = vmatpush1.msra.mxu0 0.0
    %132 = vmatprep.subr.mxu0 0.0
    %133 = vmatpush1.msra.mxu0 0.0
    %134 = vmatprep.subr.mxu0 0.0
    %135 = vmatpush1.msra.mxu0 0.0
    %136 = vmatprep.subr.mxu0 0.0
    %137 = vmatpush1.msra.mxu0 0.0
    %138 = vmatprep.subr.mxu0 0.0
    %139 = vmatpush1.msra.mxu0 0.0
    %140 = vmatprep.subr.mxu0 0.0
    %141 = vmatpush1.msra.mxu0 0.0
    %142 = vmatprep.subr.mxu0 0.0
    %143 = vmatpush1.msra.mxu0 0.0
    %144 = vmatprep.subr.mxu0 0.0
    %145 = vmatpush1.msra.mxu0 0.0
    %146 = vmatprep.subr.mxu0 0.0
    %147 = vmatpush1.msra.mxu0 0.0
    %148 = vmatprep.subr.mxu0 0.0
    %149 = vmatpush1.msra.mxu0 0.0
    %150 = vmatprep.subr.mxu0 0.0
    %151 = vmatpush1.msra.mxu0 0.0
    %152 = vmatprep.subr.mxu0 0.0
    %153 = vmatpush1.msra.mxu0 0.0
    %154 = vmatprep.subr.mxu0 0.0
    %155 = vmatpush1.msra.mxu0 0.0
    %156 = vmatprep.subr.mxu0 0.0
    %157 = vmatpush1.msra.mxu0 0.0
    %158 = vmatprep.subr.mxu0 0.0
    %159 = vmatpush1.msra.mxu0 0.0
    %160 = vmatprep.subr.mxu0 0.0
    %161 = vmatpush1.msra.mxu0 0.0
    %162 = vmatprep.subr.mxu0 0.0
    %163 = vmatpush1.msra.mxu0 0.0
    %164 = vmatprep.subr.mxu0 0.0
    %165 = vmatpush1.msra.mxu0 0.0
    %166 = vmatprep.subr.mxu0 0.0
    %167 = vmatpush1.msra.mxu0 0.0
    %168 = vmatprep.subr.mxu0 0.0
    %169 = vmatpush1.msra.mxu0 0.0
    %170 = vmatprep.subr.mxu0 0.0
    %171 = vmatpush1.msra.mxu0 0.0
    %172 = vmatprep.subr.mxu0 0.0
    %173 = vmatpush1.msra.mxu0 0.0
    %174 = vmatprep.subr.mxu0 0.0
    %175 = vmatpush1.msra.mxu0 0.0
    %176 = vmatprep.subr.mxu0 0.0
    %177 = vmatpush1.msra.mxu0 0.0
    %178 = vmatprep.subr.mxu0 0.0
    %179 = vmatpush1.msra.mxu0 0.0
    %180 = vmatprep.subr.mxu0 0.0
    %181 = vmatpush1.msra.mxu0 0.0
    %182 = vmatprep.subr.mxu0 0.0
    %183 = vmatpush1.msra.mxu0 0.0
    %184 = vmatprep.subr.mxu0 0.0
    %185 = vmatpush1.msra.mxu0 0.0
    %186 = vmatprep.subr.mxu0 0.0
    %187 = vmatpush1.msra.mxu0 0.0
    %188 = vmatprep.mubr.f32.mxu0 0.0
    %189 = vmatmul.mubr.f32.gmra.mrb[0].mxu0 %v77
    %v190 = vpop.f32.mrb[0].mxu0
    %v191 = vadd.f32 0.0, %v190
    %v192 = vpop.f32.mrb[0].mxu0
    %193 = vmatprep.mubr.f32.mxu0 0.0
    %194 = vmatmul.mubr.f32.gmra.mrb[0].mxu0 %v80
    %v195 = vpop.f32.mrb[0].mxu0
    %v196 = vadd.f32 0.0, %v195
    %v197 = vpop.f32.mrb[0].mxu0
    %198 = vmatprep.mubr.f32.mxu0 0.0
    %199 = vmatmul.mubr.f32.gmra.mrb[0].mxu0 %v83
    %v200 = vpop.f32.mrb[0].mxu0
    %v201 = vadd.f32 0.0, %v200
    %v202 = vpop.f32.mrb[0].mxu0
    %203 = vmatprep.mubr.f32.mxu0 0.0
    %204 = vmatmul.mubr.f32.gmra.mrb[0].mxu0 %v86
    %v205 = vpop.f32.mrb[0].mxu0
    %v206 = vadd.f32 0.0, %v205
    %v207 = vpop.f32.mrb[0].mxu0
    %208 = vmatprep.mubr.f32.mxu0 0.0
    %209 = vmatmul.mubr.f32.gmra.mrb[0].mxu0 %v89
    %v210 = vpop.f32.mrb[0].mxu0
    %v211 = vadd.f32 0.0, %v210
    %v212 = vpop.f32.mrb[0].mxu0
    %213 = vmatprep.mubr.f32.mxu0 0.0
    %214 = vmatmul.mubr.f32.gmra.mrb[0].mxu0 %v92
    %v215 = vpop.f32.mrb[0].mxu0
    %v216 = vadd.f32 0.0, %v215
    %v217 = vpop.f32.mrb[0].mxu0
    %218 = vmatprep.mubr.f32.mxu0 0.0
    %219 = vmatmul.mubr.f32.gmra.mrb[0].mxu0 %v95
    %v220 = vpop.f32.mrb[0].mxu0
    %v221 = vadd.f32 0.0, %v220
    %v222 = vpop.f32.mrb[0].mxu0
    %223 = vmatprep.mubr.f32.mxu0 0.0
    %224 = vmatmul.mubr.f32.gmra.mrb[0].mxu0 %v98
    %v225 = vpop.f32.mrb[0].mxu0
    %v226 = vadd.f32 0.0, %v225
    %v227 = vpop.f32.mrb[0].mxu0
    %228 = vmatprep.mubr.f32.mxu0 0.0
    %229 = vmatmul.mubr.f32.gmra.mrb[0].mxu0 %v101
    %v230 = vpop.f32.mrb[0].mxu0
    %v231 = vadd.f32 0.0, %v230
    %v232 = vpop.f32.mrb[0].mxu0
    %233 = vmatprep.mubr.f32.mxu0 0.0
    %234 = vmatmul.mubr.f32.gmra.mrb[0].mxu0 %v104
    %v235 = vpop.f32.mrb[0].mxu0
    %v236 = vadd.f32 0.0, %v235
    %v237 = vpop.f32.mrb[0].mxu0
    %238 = vmatprep.mubr.f32.mxu0 0.0
    %239 = vmatmul.mubr.f32.gmra.mrb[0].mxu0 %v107
    %v240 = vpop.f32.mrb[0].mxu0
    %v241 = vadd.f32 0.0, %v240
    %v242 = vpop.f32.mrb[0].mxu0
    %243 = vmatprep.mubr.f32.mxu0 0.0
    %244 = vmatmul.mubr.f32.gmra.mrb[0].mxu0 %v110
    %v245 = vpop.f32.mrb[0].mxu0
    %v246 = vadd.f32 0.0, %v245
    %v247 = vpop.f32.mrb[0].mxu0
    %248 = vmatprep.mubr.f32.mxu0 0.0
    %249 = vmatmul.mubr.f32.gmra.mrb[0].mxu0 %v113
    %v250 = vpop.f32.mrb[0].mxu0
    %v251 = vadd.f32 0.0, %v250
    %v252 = vpop.f32.mrb[0].mxu0
    %253 = vmatprep.mubr.f32.mxu0 0.0
    %254 = vmatmul.mubr.f32.gmra.mrb[0].mxu0 %v116
    %v255 = vpop.f32.mrb[0].mxu0
    %v256 = vadd.f32 0.0, %v255
    %v257 = vpop.f32.mrb[0].mxu0
    %258 = vmatprep.mubr.f32.mxu0 0.0
    %259 = vmatmul.mubr.f32.gmra.mrb[0].mxu0 %v119
    %v260 = vpop.f32.mrb[0].mxu0
    %v261 = vadd.f32 0.0, %v260
    %v262 = vpop.f32.mrb[0].mxu0
    %263 = vmatprep.mubr.f32.mxu0 0.0
    %264 = vmatmul.mubr.f32.gmra.mrb[0].mxu0 %v122
    %v265 = vpop.f32.mrb[0].mxu0
    %v266 = vadd.f32 0.0, %v265
    %v267 = vpop.f32.mrb[0].mxu0
    %268 = vdwg.mxu0
    %v269 = vld [vmem:[%s1] sm:$0x3]
    %v272 = vunpack.c.l.s4 1966171168
    %v273 = vunpack.c.0.s8 %v272
    %v274 = vlaneseq
    %v275 = vshrl.u32 %v274, 7
    %v276 = vsub.s32 %v273, %v275
    %v277 = vrot.slane %v269, %v276
    %v278 = vcombine.high %v277, %v277
    %v280 = vunpack.c.l.s4 1966171168
    %v281 = vunpack.c.0.s8 %v280
    %v282 = vlaneseq
    %v283 = vshrl.u32 %v282, 7
    %v284 = vsub.s32 %v281, %v283
    %v285 = vrot.slane %v277, %v284
    %v287 = vunpack.c.l.s4 1966171168
    %v288 = vunpack.c.0.s8 %v287
    %v289 = vlaneseq
    %v290 = vshrl.u32 %v289, 7
    %v291 = vsub.s32 %v288, %v290
    %v292 = vrot.slane %v278, %v291
    %v293 = vlaneseq
    %v294 = vshrl.u32 %v293, 7
    %v295 = vsub.s32 0, %v294
    %v296 = vrot.slane %v285, %v295
    %v297 = vlaneseq
    %v298 = vshrl.u32 %v297, 7
    %v299 = vsub.s32 0, %v298
    %v300 = vrot.slane %v292, %v299
    %v303 = vadd.f32 %v191, %v296
    %v304 = vadd.f32 %v196, %v296
    %v305 = vadd.f32 %v201, %v296
    %v306 = vadd.f32 %v206, %v296
    %v307 = vadd.f32 %v211, %v296
    %v308 = vadd.f32 %v216, %v296
    %v309 = vadd.f32 %v221, %v296
    %v310 = vadd.f32 %v226, %v296
    %v311 = vadd.f32 %v231, %v296
    %v312 = vadd.f32 %v236, %v296
    %v313 = vadd.f32 %v241, %v296
    %v314 = vadd.f32 %v246, %v296
    %v315 = vadd.f32 %v251, %v296
    %v316 = vadd.f32 %v256, %v296
    %v317 = vadd.f32 %v261, %v296
    %v318 = vadd.f32 %v266, %v296
    %v319 = vadd.f32 %v191, %v300
    %v320 = vadd.f32 %v196, %v300
    %v321 = vadd.f32 %v201, %v300
    %v322 = vadd.f32 %v206, %v300
    %v323 = vadd.f32 %v211, %v300
    %v324 = vadd.f32 %v216, %v300
    %v325 = vadd.f32 %v221, %v300
    %v326 = vadd.f32 %v226, %v300
    %v327 = vadd.f32 %v231, %v300
    %v328 = vadd.f32 %v236, %v300
    %v329 = vadd.f32 %v241, %v300
    %v330 = vadd.f32 %v246, %v300
    %v331 = vadd.f32 %v251, %v300
    %v332 = vadd.f32 %v256, %v300
    %v333 = vadd.f32 %v261, %v300
    %v334 = vadd.f32 %v266, %v300
    %v335 = vld [vmem:[%s3] sm:$0x1]
    %v336 = vld [vmem:[%s4] sm:$0x1]
    %v337 = vadd.f32 %v303, %v304
    %v338 = vadd.f32 %v337, %v305
    %v339 = vadd.f32 %v338, %v306
    %v340 = vadd.f32 %v339, %v307
    %v341 = vadd.f32 %v340, %v308
    %v342 = vadd.f32 %v341, %v309
    %v343 = vadd.f32 %v342, %v310
    %v344 = vadd.f32 %v343, %v311
    %v345 = vadd.f32 %v344, %v312
    %v346 = vadd.f32 %v345, %v313
    %v347 = vadd.f32 %v346, %v314
    %v348 = vadd.f32 %v347, %v315
    %v349 = vadd.f32 %v348, %v316
    %v350 = vadd.f32 %v349, %v317
    %v351 = vadd.f32 %v350, %v318
    %v352 = vadd.f32 %v351, %v319
    %v353 = vadd.f32 %v352, %v320
    %v354 = vadd.f32 %v353, %v321
    %v355 = vadd.f32 %v354, %v322
    %v356 = vadd.f32 %v355, %v323
    %v357 = vadd.f32 %v356, %v324
    %v358 = vadd.f32 %v357, %v325
    %v359 = vadd.f32 %v358, %v326
    %v360 = vadd.f32 %v359, %v327
    %v361 = vadd.f32 %v360, %v328
    %v362 = vadd.f32 %v361, %v329
    %v363 = vadd.f32 %v362, %v330
    %v364 = vadd.f32 %v363, %v331
    %v365 = vadd.f32 %v364, %v332
    %v366 = vadd.f32 %v365, %v333
    %v367 = vadd.f32 %v366, %v334
    %v368 = vrot.slane %v367, 4
    %v369 = vadd.f32 %v367, %v368
    %v370 = vrot.slane %v369, 2
    %v371 = vadd.f32 %v369, %v370
    %v372 = vrot.slane %v371, 1
    %v373 = vadd.f32 %v371, %v372
    %v374 = vmul.f32 %v373, 0.00390625
    %v375 = vsub.f32 %v303, %v374
    %v376 = vsub.f32 %v304, %v374
    %v377 = vsub.f32 %v305, %v374
    %v378 = vsub.f32 %v306, %v374
    %v379 = vsub.f32 %v307, %v374
    %v380 = vsub.f32 %v308, %v374
    %v381 = vsub.f32 %v309, %v374
    %v382 = vsub.f32 %v310, %v374
    %v383 = vsub.f32 %v311, %v374
    %v384 = vsub.f32 %v312, %v374
    %v385 = vsub.f32 %v313, %v374
    %v386 = vsub.f32 %v314, %v374
    %v387 = vsub.f32 %v315, %v374
    %v388 = vsub.f32 %v316, %v374
    %v389 = vsub.f32 %v317, %v374
    %v390 = vsub.f32 %v318, %v374
    %v391 = vsub.f32 %v319, %v374
    %v392 = vsub.f32 %v320, %v374
    %v393 = vsub.f32 %v321, %v374
    %v394 = vsub.f32 %v322, %v374
    %v395 = vsub.f32 %v323, %v374
    %v396 = vsub.f32 %v324, %v374
    %v397 = vsub.f32 %v325, %v374
    %v398 = vsub.f32 %v326, %v374
    %v399 = vsub.f32 %v327, %v374
    %v400 = vsub.f32 %v328, %v374
    %v401 = vsub.f32 %v329, %v374
    %v402 = vsub.f32 %v330, %v374
    %v403 = vsub.f32 %v331, %v374
    %v404 = vsub.f32 %v332, %v374
    %v405 = vsub.f32 %v333, %v374
    %v406 = vsub.f32 %v334, %v374
    %v407 = vmul.f32 %v375, %v375
    %v408 = vmul.f32 %v376, %v376
    %v409 = vmul.f32 %v377, %v377
    %v410 = vmul.f32 %v378, %v378
    %v411 = vmul.f32 %v379, %v379
    %v412 = vmul.f32 %v380, %v380
    %v413 = vmul.f32 %v381, %v381
    %v414 = vmul.f32 %v382, %v382
    %v415 = vmul.f32 %v383, %v383
    %v416 = vmul.f32 %v384, %v384
    %v417 = vmul.f32 %v385, %v385
    %v418 = vmul.f32 %v386, %v386
    %v419 = vmul.f32 %v387, %v387
    %v420 = vmul.f32 %v388, %v388
    %v421 = vmul.f32 %v389, %v389
    %v422 = vmul.f32 %v390, %v390
    %v423 = vmul.f32 %v391, %v391
    %v424 = vmul.f32 %v392, %v392
    %v425 = vmul.f32 %v393, %v393
    %v426 = vmul.f32 %v394, %v394
    %v427 = vmul.f32 %v395, %v395
    %v428 = vmul.f32 %v396, %v396
    %v429 = vmul.f32 %v397, %v397
    %v430 = vmul.f32 %v398, %v398
    %v431 = vmul.f32 %v399, %v399
    %v432 = vmul.f32 %v400, %v400
    %v433 = vmul.f32 %v401, %v401
    %v434 = vmul.f32 %v402, %v402
    %v435 = vmul.f32 %v403, %v403
    %v436 = vmul.f32 %v404, %v404
    %v437 = vmul.f32 %v405, %v405
    %v438 = vmul.f32 %v406, %v406
    %v439 = vadd.f32 %v407, %v408
    %v440 = vadd.f32 %v439, %v409
    %v441 = vadd.f32 %v440, %v410
    %v442 = vadd.f32 %v441, %v411
    %v443 = vadd.f32 %v442, %v412
    %v444 = vadd.f32 %v443, %v413
    %v445 = vadd.f32 %v444, %v414
    %v446 = vadd.f32 %v445, %v415
    %v447 = vadd.f32 %v446, %v416
    %v448 = vadd.f32 %v447, %v417
    %v449 = vadd.f32 %v448, %v418
    %v450 = vadd.f32 %v449, %v419
    %v451 = vadd.f32 %v450, %v420
    %v452 = vadd.f32 %v451, %v421
    %v453 = vadd.f32 %v452, %v422
    %v454 = vadd.f32 %v453, %v423
    %v455 = vadd.f32 %v454, %v424
    %v456 = vadd.f32 %v455, %v425
    %v457 = vadd.f32 %v456, %v426
    %v458 = vadd.f32 %v457, %v427
    %v459 = vadd.f32 %v458, %v428
    %v460 = vadd.f32 %v459, %v429
    %v461 = vadd.f32 %v460, %v430
    %v462 = vadd.f32 %v461, %v431
    %v463 = vadd.f32 %v462, %v432
    %v464 = vadd.f32 %v463, %v433
    %v465 = vadd.f32 %v464, %v434
    %v466 = vadd.f32 %v465, %v435
    %v467 = vadd.f32 %v466, %v436
    %v468 = vadd.f32 %v467, %v437
    %v469 = vadd.f32 %v468, %v438
    %v470 = vrot.slane %v469, 4
    %v471 = vadd.f32 %v469, %v470
    %v472 = vrot.slane %v471, 2
    %v473 = vadd.f32 %v471, %v472
    %v474 = vrot.slane %v473, 1
    %v475 = vadd.f32 %v473, %v474
    %v476 = vmul.f32 %v475, 0.00390625
    %v477 = vadd.f32 %v476, 1e-05
    %v478 = vrsqrt.pop %v477
    %v479 = vmul.f32 %v335, %v478
    %v481 = vlaneseq
    %v482 = vshrl.u32 %v481, 7
    %v483 = vsub.s32 0, %v482
    %v484 = vrot.slane %v479, %v483
    %v486 = vmul.f32 %v375, %v484
    %v487 = vmul.f32 %v376, %v484
    %v488 = vmul.f32 %v377, %v484
    %v489 = vmul.f32 %v378, %v484
    %v490 = vmul.f32 %v379, %v484
    %v491 = vmul.f32 %v380, %v484
    %v492 = vmul.f32 %v381, %v484
    %v493 = vmul.f32 %v382, %v484
    %v494 = vmul.f32 %v383, %v484
    %v495 = vmul.f32 %v384, %v484
    %v496 = vmul.f32 %v385, %v484
    %v497 = vmul.f32 %v386, %v484
    %v498 = vmul.f32 %v387, %v484
    %v499 = vmul.f32 %v388, %v484
    %v500 = vmul.f32 %v389, %v484
    %v501 = vmul.f32 %v390, %v484
    %v502 = vmul.f32 %v391, %v484
    %v503 = vmul.f32 %v392, %v484
    %v504 = vmul.f32 %v393, %v484
    %v505 = vmul.f32 %v394, %v484
    %v506 = vmul.f32 %v395, %v484
    %v507 = vmul.f32 %v396, %v484
    %v508 = vmul.f32 %v397, %v484
    %v509 = vmul.f32 %v398, %v484
    %v510 = vmul.f32 %v399, %v484
    %v511 = vmul.f32 %v400, %v484
    %v512 = vmul.f32 %v401, %v484
    %v513 = vmul.f32 %v402, %v484
    %v514 = vmul.f32 %v403, %v484
    %v515 = vmul.f32 %v404, %v484
    %v516 = vmul.f32 %v405, %v484
    %v517 = vmul.f32 %v406, %v484
    %v519 = vlaneseq
    %v520 = vshrl.u32 %v519, 7
    %v521 = vsub.s32 0, %v520
    %v522 = vrot.slane %v336, %v521
    %v524 = vadd.f32 %v486, %v522
    %v525 = vadd.f32 %v487, %v522
    %v526 = vadd.f32 %v488, %v522
    %v527 = vadd.f32 %v489, %v522
    %v528 = vadd.f32 %v490, %v522
    %v529 = vadd.f32 %v491, %v522
    %v530 = vadd.f32 %v492, %v522
    %v531 = vadd.f32 %v493, %v522
    %v532 = vadd.f32 %v494, %v522
    %v533 = vadd.f32 %v495, %v522
    %v534 = vadd.f32 %v496, %v522
    %v535 = vadd.f32 %v497, %v522
    %v536 = vadd.f32 %v498, %v522
    %v537 = vadd.f32 %v499, %v522
    %v538 = vadd.f32 %v500, %v522
    %v539 = vadd.f32 %v501, %v522
    %v540 = vadd.f32 %v502, %v522
    %v541 = vadd.f32 %v503, %v522
    %v542 = vadd.f32 %v504, %v522
    %v543 = vadd.f32 %v505, %v522
    %v544 = vadd.f32 %v506, %v522
    %v545 = vadd.f32 %v507, %v522
    %v546 = vadd.f32 %v508, %v522
    %v547 = vadd.f32 %v509, %v522
    %v548 = vadd.f32 %v510, %v522
    %v549 = vadd.f32 %v511, %v522
    %v550 = vadd.f32 %v512, %v522
    %v551 = vadd.f32 %v513, %v522
    %v552 = vadd.f32 %v514, %v522
    %v553 = vadd.f32 %v515, %v522
    %v554 = vadd.f32 %v516, %v522
    %v555 = vadd.f32 %v517, %v522
    %v556 = vmax.f32 %v524, 0.0
    %v557 = vmax.f32 %v525, 0.0
    %v558 = vmax.f32 %v526, 0.0
    %v559 = vmax.f32 %v527, 0.0
    %v560 = vmax.f32 %v528, 0.0
    %v561 = vmax.f32 %v529, 0.0
    %v562 = vmax.f32 %v530, 0.0
    %v563 = vmax.f32 %v531, 0.0
    %v564 = vmax.f32 %v532, 0.0
    %v565 = vmax.f32 %v533, 0.0
    %v566 = vmax.f32 %v534, 0.0
    %v567 = vmax.f32 %v535, 0.0
    %v568 = vmax.f32 %v536, 0.0
    %v569 = vmax.f32 %v537, 0.0
    %v570 = vmax.f32 %v538, 0.0
    %v571 = vmax.f32 %v539, 0.0
    %v572 = vmax.f32 %v540, 0.0
    %v573 = vmax.f32 %v541, 0.0
    %v574 = vmax.f32 %v542, 0.0
    %v575 = vmax.f32 %v543, 0.0
    %v576 = vmax.f32 %v544, 0.0
    %v577 = vmax.f32 %v545, 0.0
    %v578 = vmax.f32 %v546, 0.0
    %v579 = vmax.f32 %v547, 0.0
    %v580 = vmax.f32 %v548, 0.0
    %v581 = vmax.f32 %v549, 0.0
    %v582 = vmax.f32 %v550, 0.0
    %v583 = vmax.f32 %v551, 0.0
    %v584 = vmax.f32 %v552, 0.0
    %v585 = vmax.f32 %v553, 0.0
    %v586 = vmax.f32 %v554, 0.0
    %v587 = vmax.f32 %v555, 0.0
    %v588 = vld [vmem:[%s5] sm:$0xff]
    %v589 = vld [vmem:[%s5 + $0x8] sm:$0xff]
    %v590 = vld [vmem:[%s5 + $0x10] sm:$0xff]
    %v591 = vld [vmem:[%s5 + $0x18] sm:$0xff]
    %v592 = vld [vmem:[%s5 + $0x20] sm:$0xff]
    %v593 = vld [vmem:[%s5 + $0x28] sm:$0xff]
    %v594 = vld [vmem:[%s5 + $0x30] sm:$0xff]
    %v595 = vld [vmem:[%s5 + $0x38] sm:$0xff]
    %v596 = vld [vmem:[%s5 + $0x40] sm:$0xff]
    %v597 = vld [vmem:[%s5 + $0x48] sm:$0xff]
    %v598 = vld [vmem:[%s5 + $0x50] sm:$0xff]
    %v599 = vld [vmem:[%s5 + $0x58] sm:$0xff]
    %v600 = vld [vmem:[%s5 + $0x60] sm:$0xff]
    %v601 = vld [vmem:[%s5 + $0x68] sm:$0xff]
    %v602 = vld [vmem:[%s5 + $0x70] sm:$0xff]
    %v603 = vld [vmem:[%s5 + $0x78] sm:$0xff]
    %604 = vmatprep.subr.mxu0 0.0
    %605 = vmatpush1.msra.mxu0 %v588
    %606 = vmatprep.subr.mxu0 0.0
    %607 = vmatpush1.msra.mxu0 %v589
    %608 = vmatprep.subr.mxu0 0.0
    %609 = vmatpush1.msra.mxu0 %v590
    %610 = vmatprep.subr.mxu0 0.0
    %611 = vmatpush1.msra.mxu0 %v591
    %612 = vmatprep.subr.mxu0 0.0
    %613 = vmatpush1.msra.mxu0 %v592
    %614 = vmatprep.subr.mxu0 0.0
    %615 = vmatpush1.msra.mxu0 %v593
    %616 = vmatprep.subr.mxu0 0.0
    %617 = vmatpush1.msra.mxu0 %v594
    %618 = vmatprep.subr.mxu0 0.0
    %619 = vmatpush1.msra.mxu0 %v595
    %620 = vmatprep.subr.mxu0 0.0
    %621 = vmatpush1.msra.mxu0 %v596
    %622 = vmatprep.subr.mxu0 0.0
    %623 = vmatpush1.msra.mxu0 %v597
    %624 = vmatprep.subr.mxu0 0.0
    %625 = vmatpush1.msra.mxu0 %v598
    %626 = vmatprep.subr.mxu0 0.0
    %627 = vmatpush1.msra.mxu0 %v599
    %628 = vmatprep.subr.mxu0 0.0
    %629 = vmatpush1.msra.mxu0 %v600
    %630 = vmatprep.subr.mxu0 0.0
    %631 = vmatpush1.msra.mxu0 %v601
    %632 = vmatprep.subr.mxu0 0.0
    %633 = vmatpush1.msra.mxu0 %v602
    %634 = vmatprep.subr.mxu0 0.0
    %635 = vmatpush1.msra.mxu0 %v603
    %636 = vmatprep.subr.mxu0 0.0
    %637 = vmatpush1.msra.mxu0 0.0
    %638 = vmatprep.subr.mxu0 0.0
    %639 = vmatpush1.msra.mxu0 0.0
    %640 = vmatprep.subr.mxu0 0.0
    %641 = vmatpush1.msra.mxu0 0.0
    %642 = vmatprep.subr.mxu0 0.0
    %643 = vmatpush1.msra.mxu0 0.0
    %644 = vmatprep.subr.mxu0 0.0
    %645 = vmatpush1.msra.mxu0 0.0
    %646 = vmatprep.subr.mxu0 0.0
    %647 = vmatpush1.msra.mxu0 0.0
    %648 = vmatprep.subr.mxu0 0.0
    %649 = vmatpush1.msra.mxu0 0.0
    %650 = vmatprep.subr.mxu0 0.0
    %651 = vmatpush1.msra.mxu0 0.0
    %652 = vmatprep.subr.mxu0 0.0
    %653 = vmatpush1.msra.mxu0 0.0
    %654 = vmatprep.subr.mxu0 0.0
    %655 = vmatpush1.msra.mxu0 0.0
    %656 = vmatprep.subr.mxu0 0.0
    %657 = vmatpush1.msra.mxu0 0.0
    %658 = vmatprep.subr.mxu0 0.0
    %659 = vmatpush1.msra.mxu0 0.0
    %660 = vmatprep.subr.mxu0 0.0
    %661 = vmatpush1.msra.mxu0 0.0
    %662 = vmatprep.subr.mxu0 0.0
    %663 = vmatpush1.msra.mxu0 0.0
    %664 = vmatprep.subr.mxu0 0.0
    %665 = vmatpush1.msra.mxu0 0.0
    %666 = vmatprep.subr.mxu0 0.0
    %667 = vmatpush1.msra.mxu0 0.0
    %668 = vmatprep.mubr.f32.mxu0 0.0
    %669 = vmatmul.mubr.f32.gmra.mrb[0].mxu0 %v556
    %v670 = vpop.f32.mrb[0].mxu0
    %v671 = vadd.f32 0.0, %v670
    %v672 = vpop.f32.mrb[0].mxu0
    %673 = vmatprep.mubr.f32.mxu0 0.0
    %674 = vmatmul.mubr.f32.gmra.mrb[0].mxu0 %v557
    %v675 = vpop.f32.mrb[0].mxu0
    %v676 = vadd.f32 0.0, %v675
    %v677 = vpop.f32.mrb[0].mxu0
    %678 = vmatprep.mubr.f32.mxu0 0.0
    %679 = vmatmul.mubr.f32.gmra.mrb[0].mxu0 %v558
    %v680 = vpop.f32.mrb[0].mxu0
    %v681 = vadd.f32 0.0, %v680
    %v682 = vpop.f32.mrb[0].mxu0
    %683 = vmatprep.mubr.f32.mxu0 0.0
    %684 = vmatmul.mubr.f32.gmra.mrb[0].mxu0 %v559
    %v685 = vpop.f32.mrb[0].mxu0
    %v686 = vadd.f32 0.0, %v685
    %v687 = vpop.f32.mrb[0].mxu0
    %688 = vmatprep.mubr.f32.mxu0 0.0
    %689 = vmatmul.mubr.f32.gmra.mrb[0].mxu0 %v560
    %v690 = vpop.f32.mrb[0].mxu0
    %v691 = vadd.f32 0.0, %v690
    %v692 = vpop.f32.mrb[0].mxu0
    %693 = vmatprep.mubr.f32.mxu0 0.0
    %694 = vmatmul.mubr.f32.gmra.mrb[0].mxu0 %v561
    %v695 = vpop.f32.mrb[0].mxu0
    %v696 = vadd.f32 0.0, %v695
    %v697 = vpop.f32.mrb[0].mxu0
    %698 = vmatprep.mubr.f32.mxu0 0.0
    %699 = vmatmul.mubr.f32.gmra.mrb[0].mxu0 %v562
    %v700 = vpop.f32.mrb[0].mxu0
    %v701 = vadd.f32 0.0, %v700
    %v702 = vpop.f32.mrb[0].mxu0
    %703 = vmatprep.mubr.f32.mxu0 0.0
    %704 = vmatmul.mubr.f32.gmra.mrb[0].mxu0 %v563
    %v705 = vpop.f32.mrb[0].mxu0
    %v706 = vadd.f32 0.0, %v705
    %v707 = vpop.f32.mrb[0].mxu0
    %708 = vmatprep.mubr.f32.mxu0 0.0
    %709 = vmatmul.mubr.f32.gmra.mrb[0].mxu0 %v564
    %v710 = vpop.f32.mrb[0].mxu0
    %v711 = vadd.f32 0.0, %v710
    %v712 = vpop.f32.mrb[0].mxu0
    %713 = vmatprep.mubr.f32.mxu0 0.0
    %714 = vmatmul.mubr.f32.gmra.mrb[0].mxu0 %v565
    %v715 = vpop.f32.mrb[0].mxu0
    %v716 = vadd.f32 0.0, %v715
    %v717 = vpop.f32.mrb[0].mxu0
    %718 = vmatprep.mubr.f32.mxu0 0.0
    %719 = vmatmul.mubr.f32.gmra.mrb[0].mxu0 %v566
    %v720 = vpop.f32.mrb[0].mxu0
    %v721 = vadd.f32 0.0, %v720
    %v722 = vpop.f32.mrb[0].mxu0
    %723 = vmatprep.mubr.f32.mxu0 0.0
    %724 = vmatmul.mubr.f32.gmra.mrb[0].mxu0 %v567
    %v725 = vpop.f32.mrb[0].mxu0
    %v726 = vadd.f32 0.0, %v725
    %v727 = vpop.f32.mrb[0].mxu0
    %728 = vmatprep.mubr.f32.mxu0 0.0
    %729 = vmatmul.mubr.f32.gmra.mrb[0].mxu0 %v568
    %v730 = vpop.f32.mrb[0].mxu0
    %v731 = vadd.f32 0.0, %v730
    %v732 = vpop.f32.mrb[0].mxu0
    %733 = vmatprep.mubr.f32.mxu0 0.0
    %734 = vmatmul.mubr.f32.gmra.mrb[0].mxu0 %v569
    %v735 = vpop.f32.mrb[0].mxu0
    %v736 = vadd.f32 0.0, %v735
    %v737 = vpop.f32.mrb[0].mxu0
    %738 = vmatprep.mubr.f32.mxu0 0.0
    %739 = vmatmul.mubr.f32.gmra.mrb[0].mxu0 %v570
    %v740 = vpop.f32.mrb[0].mxu0
    %v741 = vadd.f32 0.0, %v740
    %v742 = vpop.f32.mrb[0].mxu0
    %743 = vmatprep.mubr.f32.mxu0 0.0
    %744 = vmatmul.mubr.f32.gmra.mrb[0].mxu0 %v571
    %v745 = vpop.f32.mrb[0].mxu0
    %v746 = vadd.f32 0.0, %v745
    %v747 = vpop.f32.mrb[0].mxu0
    %748 = vmatprep.mubr.f32.mxu0 0.0
    %749 = vmatmul.mubr.f32.gmra.mrb[0].mxu0 %v572
    %v750 = vpop.f32.mrb[0].mxu0
    %v751 = vadd.f32 0.0, %v750
    %v752 = vpop.f32.mrb[0].mxu0
    %753 = vmatprep.mubr.f32.mxu0 0.0
    %754 = vmatmul.mubr.f32.gmra.mrb[0].mxu0 %v573
    %v755 = vpop.f32.mrb[0].mxu0
    %v756 = vadd.f32 0.0, %v755
    %v757 = vpop.f32.mrb[0].mxu0
    %758 = vmatprep.mubr.f32.mxu0 0.0
    %759 = vmatmul.mubr.f32.gmra.mrb[0].mxu0 %v574
    %v760 = vpop.f32.mrb[0].mxu0
    %v761 = vadd.f32 0.0, %v760
    %v762 = vpop.f32.mrb[0].mxu0
    %763 = vmatprep.mubr.f32.mxu0 0.0
    %764 = vmatmul.mubr.f32.gmra.mrb[0].mxu0 %v575
    %v765 = vpop.f32.mrb[0].mxu0
    %v766 = vadd.f32 0.0, %v765
    %v767 = vpop.f32.mrb[0].mxu0
    %768 = vmatprep.mubr.f32.mxu0 0.0
    %769 = vmatmul.mubr.f32.gmra.mrb[0].mxu0 %v576
    %v770 = vpop.f32.mrb[0].mxu0
    %v771 = vadd.f32 0.0, %v770
    %v772 = vpop.f32.mrb[0].mxu0
    %773 = vmatprep.mubr.f32.mxu0 0.0
    %774 = vmatmul.mubr.f32.gmra.mrb[0].mxu0 %v577
    %v775 = vpop.f32.mrb[0].mxu0
    %v776 = vadd.f32 0.0, %v775
    %v777 = vpop.f32.mrb[0].mxu0
    %778 = vmatprep.mubr.f32.mxu0 0.0
    %779 = vmatmul.mubr.f32.gmra.mrb[0].mxu0 %v578
    %v780 = vpop.f32.mrb[0].mxu0
    %v781 = vadd.f32 0.0, %v780
    %v782 = vpop.f32.mrb[0].mxu0
    %783 = vmatprep.mubr.f32.mxu0 0.0
    %784 = vmatmul.mubr.f32.gmra.mrb[0].mxu0 %v579
    %v785 = vpop.f32.mrb[0].mxu0
    %v786 = vadd.f32 0.0, %v785
    %v787 = vpop.f32.mrb[0].mxu0
    %788 = vmatprep.mubr.f32.mxu0 0.0
    %789 = vmatmul.mubr.f32.gmra.mrb[0].mxu0 %v580
    %v790 = vpop.f32.mrb[0].mxu0
    %v791 = vadd.f32 0.0, %v790
    %v792 = vpop.f32.mrb[0].mxu0
    %793 = vmatprep.mubr.f32.mxu0 0.0
    %794 = vmatmul.mubr.f32.gmra.mrb[0].mxu0 %v581
    %v795 = vpop.f32.mrb[0].mxu0
    %v796 = vadd.f32 0.0, %v795
    %v797 = vpop.f32.mrb[0].mxu0
    %798 = vmatprep.mubr.f32.mxu0 0.0
    %799 = vmatmul.mubr.f32.gmra.mrb[0].mxu0 %v582
    %v800 = vpop.f32.mrb[0].mxu0
    %v801 = vadd.f32 0.0, %v800
    %v802 = vpop.f32.mrb[0].mxu0
    %803 = vmatprep.mubr.f32.mxu0 0.0
    %804 = vmatmul.mubr.f32.gmra.mrb[0].mxu0 %v583
    %v805 = vpop.f32.mrb[0].mxu0
    %v806 = vadd.f32 0.0, %v805
    %v807 = vpop.f32.mrb[0].mxu0
    %808 = vmatprep.mubr.f32.mxu0 0.0
    %809 = vmatmul.mubr.f32.gmra.mrb[0].mxu0 %v584
    %v810 = vpop.f32.mrb[0].mxu0
    %v811 = vadd.f32 0.0, %v810
    %v812 = vpop.f32.mrb[0].mxu0
    %813 = vmatprep.mubr.f32.mxu0 0.0
    %814 = vmatmul.mubr.f32.gmra.mrb[0].mxu0 %v585
    %v815 = vpop.f32.mrb[0].mxu0
    %v816 = vadd.f32 0.0, %v815
    %v817 = vpop.f32.mrb[0].mxu0
    %818 = vmatprep.mubr.f32.mxu0 0.0
    %819 = vmatmul.mubr.f32.gmra.mrb[0].mxu0 %v586
    %v820 = vpop.f32.mrb[0].mxu0
    %v821 = vadd.f32 0.0, %v820
    %v822 = vpop.f32.mrb[0].mxu0
    %823 = vmatprep.mubr.f32.mxu0 0.0
    %824 = vmatmul.mubr.f32.gmra.mrb[0].mxu0 %v587
    %v825 = vpop.f32.mrb[0].mxu0
    %v826 = vadd.f32 0.0, %v825
    %v827 = vpop.f32.mrb[0].mxu0
    %828 = vdwg.mxu0
    %v829 = vld [vmem:[%s6] sm:$0x1]
    %v830 = vld [vmem:[%s7] sm:$0x1]
    %v831 = vadd.f32 %v671, %v676
    %v832 = vadd.f32 %v831, %v681
    %v833 = vadd.f32 %v832, %v686
    %v834 = vadd.f32 %v833, %v691
    %v835 = vadd.f32 %v834, %v696
    %v836 = vadd.f32 %v835, %v701
    %v837 = vadd.f32 %v836, %v706
    %v838 = vadd.f32 %v837, %v711
    %v839 = vadd.f32 %v838, %v716
    %v840 = vadd.f32 %v839, %v721
    %v841 = vadd.f32 %v840, %v726
    %v842 = vadd.f32 %v841, %v731
    %v843 = vadd.f32 %v842, %v736
    %v844 = vadd.f32 %v843, %v741
    %v845 = vadd.f32 %v844, %v746
    %v846 = vadd.f32 %v845, %v751
    %v847 = vadd.f32 %v846, %v756
    %v848 = vadd.f32 %v847, %v761
    %v849 = vadd.f32 %v848, %v766
    %v850 = vadd.f32 %v849, %v771
    %v851 = vadd.f32 %v850, %v776
    %v852 = vadd.f32 %v851, %v781
    %v853 = vadd.f32 %v852, %v786
    %v854 = vadd.f32 %v853, %v791
    %v855 = vadd.f32 %v854, %v796
    %v856 = vadd.f32 %v855, %v801
    %v857 = vadd.f32 %v856, %v806
    %v858 = vadd.f32 %v857, %v811
    %v859 = vadd.f32 %v858, %v816
    %v860 = vadd.f32 %v859, %v821
    %v861 = vadd.f32 %v860, %v826
    %v862 = vrot.slane %v861, 4
    %v863 = vadd.f32 %v861, %v862
    %v864 = vrot.slane %v863, 2
    %v865 = vadd.f32 %v863, %v864
    %v866 = vrot.slane %v865, 1
    %v867 = vadd.f32 %v865, %v866
    %v868 = vmul.f32 %v867, 0.00390625
    %v869 = vsub.f32 %v671, %v868
    %v870 = vsub.f32 %v676, %v868
    %v871 = vsub.f32 %v681, %v868
    %v872 = vsub.f32 %v686, %v868
    %v873 = vsub.f32 %v691, %v868
    %v874 = vsub.f32 %v696, %v868
    %v875 = vsub.f32 %v701, %v868
    %v876 = vsub.f32 %v706, %v868
    %v877 = vsub.f32 %v711, %v868
    %v878 = vsub.f32 %v716, %v868
    %v879 = vsub.f32 %v721, %v868
    %v880 = vsub.f32 %v726, %v868
    %v881 = vsub.f32 %v731, %v868
    %v882 = vsub.f32 %v736, %v868
    %v883 = vsub.f32 %v741, %v868
    %v884 = vsub.f32 %v746, %v868
    %v885 = vsub.f32 %v751, %v868
    %v886 = vsub.f32 %v756, %v868
    %v887 = vsub.f32 %v761, %v868
    %v888 = vsub.f32 %v766, %v868
    %v889 = vsub.f32 %v771, %v868
    %v890 = vsub.f32 %v776, %v868
    %v891 = vsub.f32 %v781, %v868
    %v892 = vsub.f32 %v786, %v868
    %v893 = vsub.f32 %v791, %v868
    %v894 = vsub.f32 %v796, %v868
    %v895 = vsub.f32 %v801, %v868
    %v896 = vsub.f32 %v806, %v868
    %v897 = vsub.f32 %v811, %v868
    %v898 = vsub.f32 %v816, %v868
    %v899 = vsub.f32 %v821, %v868
    %v900 = vsub.f32 %v826, %v868
    %v901 = vmul.f32 %v869, %v869
    %v902 = vmul.f32 %v870, %v870
    %v903 = vmul.f32 %v871, %v871
    %v904 = vmul.f32 %v872, %v872
    %v905 = vmul.f32 %v873, %v873
    %v906 = vmul.f32 %v874, %v874
    %v907 = vmul.f32 %v875, %v875
    %v908 = vmul.f32 %v876, %v876
    %v909 = vmul.f32 %v877, %v877
    %v910 = vmul.f32 %v878, %v878
    %v911 = vmul.f32 %v879, %v879
    %v912 = vmul.f32 %v880, %v880
    %v913 = vmul.f32 %v881, %v881
    %v914 = vmul.f32 %v882, %v882
    %v915 = vmul.f32 %v883, %v883
    %v916 = vmul.f32 %v884, %v884
    %v917 = vmul.f32 %v885, %v885
    %v918 = vmul.f32 %v886, %v886
    %v919 = vmul.f32 %v887, %v887
    %v920 = vmul.f32 %v888, %v888
    %v921 = vmul.f32 %v889, %v889
    %v922 = vmul.f32 %v890, %v890
    %v923 = vmul.f32 %v891, %v891
    %v924 = vmul.f32 %v892, %v892
    %v925 = vmul.f32 %v893, %v893
    %v926 = vmul.f32 %v894, %v894
    %v927 = vmul.f32 %v895, %v895
    %v928 = vmul.f32 %v896, %v896
    %v929 = vmul.f32 %v897, %v897
    %v930 = vmul.f32 %v898, %v898
    %v931 = vmul.f32 %v899, %v899
    %v932 = vmul.f32 %v900, %v900
    %v933 = vadd.f32 %v901, %v902
    %v934 = vadd.f32 %v933, %v903
    %v935 = vadd.f32 %v934, %v904
    %v936 = vadd.f32 %v935, %v905
    %v937 = vadd.f32 %v936, %v906
    %v938 = vadd.f32 %v937, %v907
    %v939 = vadd.f32 %v938, %v908
    %v940 = vadd.f32 %v939, %v909
    %v941 = vadd.f32 %v940, %v910
    %v942 = vadd.f32 %v941, %v911
    %v943 = vadd.f32 %v942, %v912
    %v944 = vadd.f32 %v943, %v913
    %v945 = vadd.f32 %v944, %v914
    %v946 = vadd.f32 %v945, %v915
    %v947 = vadd.f32 %v946, %v916
    %v948 = vadd.f32 %v947, %v917
    %v949 = vadd.f32 %v948, %v918
    %v950 = vadd.f32 %v949, %v919
    %v951 = vadd.f32 %v950, %v920
    %v952 = vadd.f32 %v951, %v921
    %v953 = vadd.f32 %v952, %v922
    %v954 = vadd.f32 %v953, %v923
    %v955 = vadd.f32 %v954, %v924
    %v956 = vadd.f32 %v955, %v925
    %v957 = vadd.f32 %v956, %v926
    %v958 = vadd.f32 %v957, %v927
    %v959 = vadd.f32 %v958, %v928
    %v960 = vadd.f32 %v959, %v929
    %v961 = vadd.f32 %v960, %v930
    %v962 = vadd.f32 %v961, %v931
    %v963 = vadd.f32 %v962, %v932
    %v964 = vrot.slane %v963, 4
    %v965 = vadd.f32 %v963, %v964
    %v966 = vrot.slane %v965, 2
    %v967 = vadd.f32 %v965, %v966
    %v968 = vrot.slane %v967, 1
    %v969 = vadd.f32 %v967, %v968
    %v970 = vmul.f32 %v969, 0.00390625
    %v971 = vadd.f32 %v970, 1e-05
    %v972 = vrsqrt.pop %v971
    %v973 = vmul.f32 %v829, %v972
    %v975 = vlaneseq
    %v976 = vshrl.u32 %v975, 7
    %v977 = vsub.s32 0, %v976
    %v978 = vrot.slane %v973, %v977
    %v980 = vmul.f32 %v869, %v978
    %v981 = vmul.f32 %v870, %v978
    %v982 = vmul.f32 %v871, %v978
    %v983 = vmul.f32 %v872, %v978
    %v984 = vmul.f32 %v873, %v978
    %v985 = vmul.f32 %v874, %v978
    %v986 = vmul.f32 %v875, %v978
    %v987 = vmul.f32 %v876, %v978
    %v988 = vmul.f32 %v877, %v978
    %v989 = vmul.f32 %v878, %v978
    %v990 = vmul.f32 %v879, %v978
    %v991 = vmul.f32 %v880, %v978
    %v992 = vmul.f32 %v881, %v978
    %v993 = vmul.f32 %v882, %v978
    %v994 = vmul.f32 %v883, %v978
    %v995 = vmul.f32 %v884, %v978
    %v996 = vmul.f32 %v885, %v978
    %v997 = vmul.f32 %v886, %v978
    %v998 = vmul.f32 %v887, %v978
    %v999 = vmul.f32 %v888, %v978
    %v1000 = vmul.f32 %v889, %v978
    %v1001 = vmul.f32 %v890, %v978
    %v1002 = vmul.f32 %v891, %v978
    %v1003 = vmul.f32 %v892, %v978
    %v1004 = vmul.f32 %v893, %v978
    %v1005 = vmul.f32 %v894, %v978
    %v1006 = vmul.f32 %v895, %v978
    %v1007 = vmul.f32 %v896, %v978
    %v1008 = vmul.f32 %v897, %v978
    %v1009 = vmul.f32 %v898, %v978
    %v1010 = vmul.f32 %v899, %v978
    %v1011 = vmul.f32 %v900, %v978
    %v1013 = vlaneseq
    %v1014 = vshrl.u32 %v1013, 7
    %v1015 = vsub.s32 0, %v1014
    %v1016 = vrot.slane %v830, %v1015
    %v1018 = vadd.f32 %v980, %v1016
    %v1019 = vadd.f32 %v981, %v1016
    %v1020 = vadd.f32 %v982, %v1016
    %v1021 = vadd.f32 %v983, %v1016
    %v1022 = vadd.f32 %v984, %v1016
    %v1023 = vadd.f32 %v985, %v1016
    %v1024 = vadd.f32 %v986, %v1016
    %v1025 = vadd.f32 %v987, %v1016
    %v1026 = vadd.f32 %v988, %v1016
    %v1027 = vadd.f32 %v989, %v1016
    %v1028 = vadd.f32 %v990, %v1016
    %v1029 = vadd.f32 %v991, %v1016
    %v1030 = vadd.f32 %v992, %v1016
    %v1031 = vadd.f32 %v993, %v1016
    %v1032 = vadd.f32 %v994, %v1016
    %v1033 = vadd.f32 %v995, %v1016
    %v1034 = vadd.f32 %v996, %v1016
    %v1035 = vadd.f32 %v997, %v1016
    %v1036 = vadd.f32 %v998, %v1016
    %v1037 = vadd.f32 %v999, %v1016
    %v1038 = vadd.f32 %v1000, %v1016
    %v1039 = vadd.f32 %v1001, %v1016
    %v1040 = vadd.f32 %v1002, %v1016
    %v1041 = vadd.f32 %v1003, %v1016
    %v1042 = vadd.f32 %v1004, %v1016
    %v1043 = vadd.f32 %v1005, %v1016
    %v1044 = vadd.f32 %v1006, %v1016
    %v1045 = vadd.f32 %v1007, %v1016
    %v1046 = vadd.f32 %v1008, %v1016
    %v1047 = vadd.f32 %v1009, %v1016
    %v1048 = vadd.f32 %v1010, %v1016
    %v1049 = vadd.f32 %v1011, %v1016
    %v1050 = vmax.f32 %v1018, 0.0
    %v1051 = vmax.f32 %v1019, 0.0
    %v1052 = vmax.f32 %v1020, 0.0
    %v1053 = vmax.f32 %v1021, 0.0
    %v1054 = vmax.f32 %v1022, 0.0
    %v1055 = vmax.f32 %v1023, 0.0
    %v1056 = vmax.f32 %v1024, 0.0
    %v1057 = vmax.f32 %v1025, 0.0
    %v1058 = vmax.f32 %v1026, 0.0
    %v1059 = vmax.f32 %v1027, 0.0
    %v1060 = vmax.f32 %v1028, 0.0
    %v1061 = vmax.f32 %v1029, 0.0
    %v1062 = vmax.f32 %v1030, 0.0
    %v1063 = vmax.f32 %v1031, 0.0
    %v1064 = vmax.f32 %v1032, 0.0
    %v1065 = vmax.f32 %v1033, 0.0
    %v1066 = vmax.f32 %v1034, 0.0
    %v1067 = vmax.f32 %v1035, 0.0
    %v1068 = vmax.f32 %v1036, 0.0
    %v1069 = vmax.f32 %v1037, 0.0
    %v1070 = vmax.f32 %v1038, 0.0
    %v1071 = vmax.f32 %v1039, 0.0
    %v1072 = vmax.f32 %v1040, 0.0
    %v1073 = vmax.f32 %v1041, 0.0
    %v1074 = vmax.f32 %v1042, 0.0
    %v1075 = vmax.f32 %v1043, 0.0
    %v1076 = vmax.f32 %v1044, 0.0
    %v1077 = vmax.f32 %v1045, 0.0
    %v1078 = vmax.f32 %v1046, 0.0
    %v1079 = vmax.f32 %v1047, 0.0
    %v1080 = vmax.f32 %v1048, 0.0
    %v1081 = vmax.f32 %v1049, 0.0
    %v1082 = vld [vmem:[#allocation2] sm:$0xff]
    %v1083 = vld [vmem:[#allocation2 + $0x8] sm:$0xff]
    %v1084 = vld [vmem:[#allocation2 + $0x10] sm:$0xff]
    %v1085 = vld [vmem:[#allocation2 + $0x18] sm:$0xff]
    %v1086 = vld [vmem:[#allocation2 + $0x20] sm:$0xff]
    %v1087 = vld [vmem:[#allocation2 + $0x28] sm:$0xff]
    %v1088 = vld [vmem:[#allocation2 + $0x30] sm:$0xff]
    %v1089 = vld [vmem:[#allocation2 + $0x38] sm:$0xff]
    %v1090 = vld [vmem:[#allocation2 + $0x40] sm:$0xff]
    %v1091 = vld [vmem:[#allocation2 + $0x48] sm:$0xff]
    %v1092 = vld [vmem:[#allocation2 + $0x50] sm:$0xff]
    %v1093 = vld [vmem:[#allocation2 + $0x58] sm:$0xff]
    %v1094 = vld [vmem:[#allocation2 + $0x60] sm:$0xff]
    %v1095 = vld [vmem:[#allocation2 + $0x68] sm:$0xff]
    %v1096 = vld [vmem:[#allocation2 + $0x70] sm:$0xff]
    %v1097 = vld [vmem:[#allocation2 + $0x78] sm:$0xff]
    %1098 = vmatprep.subr.mxu0 0.0
    %1099 = vmatpush1.msra.mxu0 %v1082
    %1100 = vmatprep.subr.mxu0 0.0
    %1101 = vmatpush1.msra.mxu0 %v1083
    %1102 = vmatprep.subr.mxu0 0.0
    %1103 = vmatpush1.msra.mxu0 %v1084
    %1104 = vmatprep.subr.mxu0 0.0
    %1105 = vmatpush1.msra.mxu0 %v1085
    %1106 = vmatprep.subr.mxu0 0.0
    %1107 = vmatpush1.msra.mxu0 %v1086
    %1108 = vmatprep.subr.mxu0 0.0
    %1109 = vmatpush1.msra.mxu0 %v1087
    %1110 = vmatprep.subr.mxu0 0.0
    %1111 = vmatpush1.msra.mxu0 %v1088
    %1112 = vmatprep.subr.mxu0 0.0
    %1113 = vmatpush1.msra.mxu0 %v1089
    %1114 = vmatprep.subr.mxu0 0.0
    %1115 = vmatpush1.msra.mxu0 %v1090
    %1116 = vmatprep.subr.mxu0 0.0
    %1117 = vmatpush1.msra.mxu0 %v1091
    %1118 = vmatprep.subr.mxu0 0.0
    %1119 = vmatpush1.msra.mxu0 %v1092
    %1120 = vmatprep.subr.mxu0 0.0
    %1121 = vmatpush1.msra.mxu0 %v1093
    %1122 = vmatprep.subr.mxu0 0.0
    %1123 = vmatpush1.msra.mxu0 %v1094
    %1124 = vmatprep.subr.mxu0 0.0
    %1125 = vmatpush1.msra.mxu0 %v1095
    %1126 = vmatprep.subr.mxu0 0.0
    %1127 = vmatpush1.msra.mxu0 %v1096
    %1128 = vmatprep.subr.mxu0 0.0
    %1129 = vmatpush1.msra.mxu0 %v1097
    %1130 = vmatprep.subr.mxu0 0.0
    %1131 = vmatpush1.msra.mxu0 0.0
    %1132 = vmatprep.subr.mxu0 0.0
    %1133 = vmatpush1.msra.mxu0 0.0
    %1134 = vmatprep.subr.mxu0 0.0
    %1135 = vmatpush1.msra.mxu0 0.0
    %1136 = vmatprep.subr.mxu0 0.0
    %1137 = vmatpush1.msra.mxu0 0.0
    %1138 = vmatprep.subr.mxu0 0.0
    %1139 = vmatpush1.msra.mxu0 0.0
    %1140 = vmatprep.subr.mxu0 0.0
    %1141 = vmatpush1.msra.mxu0 0.0
    %1142 = vmatprep.subr.mxu0 0.0
    %1143 = vmatpush1.msra.mxu0 0.0
    %1144 = vmatprep.subr.mxu0 0.0
    %1145 = vmatpush1.msra.mxu0 0.0
    %1146 = vmatprep.subr.mxu0 0.0
    %1147 = vmatpush1.msra.mxu0 0.0
    %1148 = vmatprep.subr.mxu0 0.0
    %1149 = vmatpush1.msra.mxu0 0.0
    %1150 = vmatprep.subr.mxu0 0.0
    %1151 = vmatpush1.msra.mxu0 0.0
    %1152 = vmatprep.subr.mxu0 0.0
    %1153 = vmatpush1.msra.mxu0 0.0
    %1154 = vmatprep.subr.mxu0 0.0
    %1155 = vmatpush1.msra.mxu0 0.0
    %1156 = vmatprep.subr.mxu0 0.0
    %1157 = vmatpush1.msra.mxu0 0.0
    %1158 = vmatprep.subr.mxu0 0.0
    %1159 = vmatpush1.msra.mxu0 0.0
    %1160 = vmatprep.subr.mxu0 0.0
    %1161 = vmatpush1.msra.mxu0 0.0
    %1162 = vmatprep.mubr.f32.mxu0 0.0
    %1163 = vmatmul.mubr.f32.gmra.mrb[0].mxu0 %v1050
    %v1164 = vpop.f32.mrb[0].mxu0
    %v1165 = vadd.f32 0.0, %v1164
    %v1166 = vpop.f32.mrb[0].mxu0
    %1167 = vmatprep.mubr.f32.mxu0 0.0
    %1168 = vmatmul.mubr.f32.gmra.mrb[0].mxu0 %v1051
    %v1169 = vpop.f32.mrb[0].mxu0
    %v1170 = vadd.f32 0.0, %v1169
    %v1171 = vpop.f32.mrb[0].mxu0
    %1172 = vmatprep.mubr.f32.mxu0 0.0
    %1173 = vmatmul.mubr.f32.gmra.mrb[0].mxu0 %v1052
    %v1174 = vpop.f32.mrb[0].mxu0
    %v1175 = vadd.f32 0.0, %v1174
    %v1176 = vpop.f32.mrb[0].mxu0
    %1177 = vmatprep.mubr.f32.mxu0 0.0
    %1178 = vmatmul.mubr.f32.gmra.mrb[0].mxu0 %v1053
    %v1179 = vpop.f32.mrb[0].mxu0
    %v1180 = vadd.f32 0.0, %v1179
    %v1181 = vpop.f32.mrb[0].mxu0
    %1182 = vmatprep.mubr.f32.mxu0 0.0
    %1183 = vmatmul.mubr.f32.gmra.mrb[0].mxu0 %v1054
    %v1184 = vpop.f32.mrb[0].mxu0
    %v1185 = vadd.f32 0.0, %v1184
    %v1186 = vpop.f32.mrb[0].mxu0
    %1187 = vmatprep.mubr.f32.mxu0 0.0
    %1188 = vmatmul.mubr.f32.gmra.mrb[0].mxu0 %v1055
    %v1189 = vpop.f32.mrb[0].mxu0
    %v1190 = vadd.f32 0.0, %v1189
    %v1191 = vpop.f32.mrb[0].mxu0
    %1192 = vmatprep.mubr.f32.mxu0 0.0
    %1193 = vmatmul.mubr.f32.gmra.mrb[0].mxu0 %v1056
    %v1194 = vpop.f32.mrb[0].mxu0
    %v1195 = vadd.f32 0.0, %v1194
    %v1196 = vpop.f32.mrb[0].mxu0
    %1197 = vmatprep.mubr.f32.mxu0 0.0
    %1198 = vmatmul.mubr.f32.gmra.mrb[0].mxu0 %v1057
    %v1199 = vpop.f32.mrb[0].mxu0
    %v1200 = vadd.f32 0.0, %v1199
    %v1201 = vpop.f32.mrb[0].mxu0
    %1202 = vmatprep.mubr.f32.mxu0 0.0
    %1203 = vmatmul.mubr.f32.gmra.mrb[0].mxu0 %v1058
    %v1204 = vpop.f32.mrb[0].mxu0
    %v1205 = vadd.f32 0.0, %v1204
    %v1206 = vpop.f32.mrb[0].mxu0
    %1207 = vmatprep.mubr.f32.mxu0 0.0
    %1208 = vmatmul.mubr.f32.gmra.mrb[0].mxu0 %v1059
    %v1209 = vpop.f32.mrb[0].mxu0
    %v1210 = vadd.f32 0.0, %v1209
    %v1211 = vpop.f32.mrb[0].mxu0
    %1212 = vmatprep.mubr.f32.mxu0 0.0
    %1213 = vmatmul.mubr.f32.gmra.mrb[0].mxu0 %v1060
    %v1214 = vpop.f32.mrb[0].mxu0
    %v1215 = vadd.f32 0.0, %v1214
    %v1216 = vpop.f32.mrb[0].mxu0
    %1217 = vmatprep.mubr.f32.mxu0 0.0
    %1218 = vmatmul.mubr.f32.gmra.mrb[0].mxu0 %v1061
    %v1219 = vpop.f32.mrb[0].mxu0
    %v1220 = vadd.f32 0.0, %v1219
    %v1221 = vpop.f32.mrb[0].mxu0
    %1222 = vmatprep.mubr.f32.mxu0 0.0
    %1223 = vmatmul.mubr.f32.gmra.mrb[0].mxu0 %v1062
    %v1224 = vpop.f32.mrb[0].mxu0
    %v1225 = vadd.f32 0.0, %v1224
    %v1226 = vpop.f32.mrb[0].mxu0
    %1227 = vmatprep.mubr.f32.mxu0 0.0
    %1228 = vmatmul.mubr.f32.gmra.mrb[0].mxu0 %v1063
    %v1229 = vpop.f32.mrb[0].mxu0
    %v1230 = vadd.f32 0.0, %v1229
    %v1231 = vpop.f32.mrb[0].mxu0
    %1232 = vmatprep.mubr.f32.mxu0 0.0
    %1233 = vmatmul.mubr.f32.gmra.mrb[0].mxu0 %v1064
    %v1234 = vpop.f32.mrb[0].mxu0
    %v1235 = vadd.f32 0.0, %v1234
    %v1236 = vpop.f32.mrb[0].mxu0
    %1237 = vmatprep.mubr.f32.mxu0 0.0
    %1238 = vmatmul.mubr.f32.gmra.mrb[0].mxu0 %v1065
    %v1239 = vpop.f32.mrb[0].mxu0
    %v1240 = vadd.f32 0.0, %v1239
    %v1241 = vpop.f32.mrb[0].mxu0
    %1242 = vmatprep.mubr.f32.mxu0 0.0
    %1243 = vmatmul.mubr.f32.gmra.mrb[0].mxu0 %v1066
    %v1244 = vpop.f32.mrb[0].mxu0
    %v1245 = vadd.f32 0.0, %v1244
    %v1246 = vpop.f32.mrb[0].mxu0
    %1247 = vmatprep.mubr.f32.mxu0 0.0
    %1248 = vmatmul.mubr.f32.gmra.mrb[0].mxu0 %v1067
    %v1249 = vpop.f32.mrb[0].mxu0
    %v1250 = vadd.f32 0.0, %v1249
    %v1251 = vpop.f32.mrb[0].mxu0
    %1252 = vmatprep.mubr.f32.mxu0 0.0
    %1253 = vmatmul.mubr.f32.gmra.mrb[0].mxu0 %v1068
    %v1254 = vpop.f32.mrb[0].mxu0
    %v1255 = vadd.f32 0.0, %v1254
    %v1256 = vpop.f32.mrb[0].mxu0
    %1257 = vmatprep.mubr.f32.mxu0 0.0
    %1258 = vmatmul.mubr.f32.gmra.mrb[0].mxu0 %v1069
    %v1259 = vpop.f32.mrb[0].mxu0
    %v1260 = vadd.f32 0.0, %v1259
    %v1261 = vpop.f32.mrb[0].mxu0
    %1262 = vmatprep.mubr.f32.mxu0 0.0
    %1263 = vmatmul.mubr.f32.gmra.mrb[0].mxu0 %v1070
    %v1264 = vpop.f32.mrb[0].mxu0
    %v1265 = vadd.f32 0.0, %v1264
    %v1266 = vpop.f32.mrb[0].mxu0
    %1267 = vmatprep.mubr.f32.mxu0 0.0
    %1268 = vmatmul.mubr.f32.gmra.mrb[0].mxu0 %v1071
    %v1269 = vpop.f32.mrb[0].mxu0
    %v1270 = vadd.f32 0.0, %v1269
    %v1271 = vpop.f32.mrb[0].mxu0
    %1272 = vmatprep.mubr.f32.mxu0 0.0
    %1273 = vmatmul.mubr.f32.gmra.mrb[0].mxu0 %v1072
    %v1274 = vpop.f32.mrb[0].mxu0
    %v1275 = vadd.f32 0.0, %v1274
    %v1276 = vpop.f32.mrb[0].mxu0
    %1277 = vmatprep.mubr.f32.mxu0 0.0
    %1278 = vmatmul.mubr.f32.gmra.mrb[0].mxu0 %v1073
    %v1279 = vpop.f32.mrb[0].mxu0
    %v1280 = vadd.f32 0.0, %v1279
    %v1281 = vpop.f32.mrb[0].mxu0
    %1282 = vmatprep.mubr.f32.mxu0 0.0
    %1283 = vmatmul.mubr.f32.gmra.mrb[0].mxu0 %v1074
    %v1284 = vpop.f32.mrb[0].mxu0
    %v1285 = vadd.f32 0.0, %v1284
    %v1286 = vpop.f32.mrb[0].mxu0
    %1287 = vmatprep.mubr.f32.mxu0 0.0
    %1288 = vmatmul.mubr.f32.gmra.mrb[0].mxu0 %v1075
    %v1289 = vpop.f32.mrb[0].mxu0
    %v1290 = vadd.f32 0.0, %v1289
    %v1291 = vpop.f32.mrb[0].mxu0
    %1292 = vmatprep.mubr.f32.mxu0 0.0
    %1293 = vmatmul.mubr.f32.gmra.mrb[0].mxu0 %v1076
    %v1294 = vpop.f32.mrb[0].mxu0
    %v1295 = vadd.f32 0.0, %v1294
    %v1296 = vpop.f32.mrb[0].mxu0
    %1297 = vmatprep.mubr.f32.mxu0 0.0
    %1298 = vmatmul.mubr.f32.gmra.mrb[0].mxu0 %v1077
    %v1299 = vpop.f32.mrb[0].mxu0
    %v1300 = vadd.f32 0.0, %v1299
    %v1301 = vpop.f32.mrb[0].mxu0
    %1302 = vmatprep.mubr.f32.mxu0 0.0
    %1303 = vmatmul.mubr.f32.gmra.mrb[0].mxu0 %v1078
    %v1304 = vpop.f32.mrb[0].mxu0
    %v1305 = vadd.f32 0.0, %v1304
    %v1306 = vpop.f32.mrb[0].mxu0
    %1307 = vmatprep.mubr.f32.mxu0 0.0
    %1308 = vmatmul.mubr.f32.gmra.mrb[0].mxu0 %v1079
    %v1309 = vpop.f32.mrb[0].mxu0
    %v1310 = vadd.f32 0.0, %v1309
    %v1311 = vpop.f32.mrb[0].mxu0
    %1312 = vmatprep.mubr.f32.mxu0 0.0
    %1313 = vmatmul.mubr.f32.gmra.mrb[0].mxu0 %v1080
    %v1314 = vpop.f32.mrb[0].mxu0
    %v1315 = vadd.f32 0.0, %v1314
    %v1316 = vpop.f32.mrb[0].mxu0
    %1317 = vmatprep.mubr.f32.mxu0 0.0
    %1318 = vmatmul.mubr.f32.gmra.mrb[0].mxu0 %v1081
    %v1319 = vpop.f32.mrb[0].mxu0
    %v1320 = vadd.f32 0.0, %v1319
    %v1321 = vpop.f32.mrb[0].mxu0
    %1322 = vdwg.mxu0
    %v1323 = vld [vmem:[%s9] sm:$0x1]
    %v1324 = vld [vmem:[%s10] sm:$0x1]
    %v1325 = vadd.f32 %v1165, %v1170
    %v1326 = vadd.f32 %v1325, %v1175
    %v1327 = vadd.f32 %v1326, %v1180
    %v1328 = vadd.f32 %v1327, %v1185
    %v1329 = vadd.f32 %v1328, %v1190
    %v1330 = vadd.f32 %v1329, %v1195
    %v1331 = vadd.f32 %v1330, %v1200
    %v1332 = vadd.f32 %v1331, %v1205
    %v1333 = vadd.f32 %v1332, %v1210
    %v1334 = vadd.f32 %v1333, %v1215
    %v1335 = vadd.f32 %v1334, %v1220
    %v1336 = vadd.f32 %v1335, %v1225
    %v1337 = vadd.f32 %v1336, %v1230
    %v1338 = vadd.f32 %v1337, %v1235
    %v1339 = vadd.f32 %v1338, %v1240
    %v1340 = vadd.f32 %v1339, %v1245
    %v1341 = vadd.f32 %v1340, %v1250
    %v1342 = vadd.f32 %v1341, %v1255
    %v1343 = vadd.f32 %v1342, %v1260
    %v1344 = vadd.f32 %v1343, %v1265
    %v1345 = vadd.f32 %v1344, %v1270
    %v1346 = vadd.f32 %v1345, %v1275
    %v1347 = vadd.f32 %v1346, %v1280
    %v1348 = vadd.f32 %v1347, %v1285
    %v1349 = vadd.f32 %v1348, %v1290
    %v1350 = vadd.f32 %v1349, %v1295
    %v1351 = vadd.f32 %v1350, %v1300
    %v1352 = vadd.f32 %v1351, %v1305
    %v1353 = vadd.f32 %v1352, %v1310
    %v1354 = vadd.f32 %v1353, %v1315
    %v1355 = vadd.f32 %v1354, %v1320
    %v1356 = vrot.slane %v1355, 4
    %v1357 = vadd.f32 %v1355, %v1356
    %v1358 = vrot.slane %v1357, 2
    %v1359 = vadd.f32 %v1357, %v1358
    %v1360 = vrot.slane %v1359, 1
    %v1361 = vadd.f32 %v1359, %v1360
    %v1362 = vmul.f32 %v1361, 0.00390625
    %v1363 = vsub.f32 %v1165, %v1362
    %v1364 = vsub.f32 %v1170, %v1362
    %v1365 = vsub.f32 %v1175, %v1362
    %v1366 = vsub.f32 %v1180, %v1362
    %v1367 = vsub.f32 %v1185, %v1362
    %v1368 = vsub.f32 %v1190, %v1362
    %v1369 = vsub.f32 %v1195, %v1362
    %v1370 = vsub.f32 %v1200, %v1362
    %v1371 = vsub.f32 %v1205, %v1362
    %v1372 = vsub.f32 %v1210, %v1362
    %v1373 = vsub.f32 %v1215, %v1362
    %v1374 = vsub.f32 %v1220, %v1362
    %v1375 = vsub.f32 %v1225, %v1362
    %v1376 = vsub.f32 %v1230, %v1362
    %v1377 = vsub.f32 %v1235, %v1362
    %v1378 = vsub.f32 %v1240, %v1362
    %v1379 = vsub.f32 %v1245, %v1362
    %v1380 = vsub.f32 %v1250, %v1362
    %v1381 = vsub.f32 %v1255, %v1362
    %v1382 = vsub.f32 %v1260, %v1362
    %v1383 = vsub.f32 %v1265, %v1362
    %v1384 = vsub.f32 %v1270, %v1362
    %v1385 = vsub.f32 %v1275, %v1362
    %v1386 = vsub.f32 %v1280, %v1362
    %v1387 = vsub.f32 %v1285, %v1362
    %v1388 = vsub.f32 %v1290, %v1362
    %v1389 = vsub.f32 %v1295, %v1362
    %v1390 = vsub.f32 %v1300, %v1362
    %v1391 = vsub.f32 %v1305, %v1362
    %v1392 = vsub.f32 %v1310, %v1362
    %v1393 = vsub.f32 %v1315, %v1362
    %v1394 = vsub.f32 %v1320, %v1362
    %v1395 = vmul.f32 %v1363, %v1363
    %v1396 = vmul.f32 %v1364, %v1364
    %v1397 = vmul.f32 %v1365, %v1365
    %v1398 = vmul.f32 %v1366, %v1366
    %v1399 = vmul.f32 %v1367, %v1367
    %v1400 = vmul.f32 %v1368, %v1368
    %v1401 = vmul.f32 %v1369, %v1369
    %v1402 = vmul.f32 %v1370, %v1370
    %v1403 = vmul.f32 %v1371, %v1371
    %v1404 = vmul.f32 %v1372, %v1372
    %v1405 = vmul.f32 %v1373, %v1373
    %v1406 = vmul.f32 %v1374, %v1374
    %v1407 = vmul.f32 %v1375, %v1375
    %v1408 = vmul.f32 %v1376, %v1376
    %v1409 = vmul.f32 %v1377, %v1377
    %v1410 = vmul.f32 %v1378, %v1378
    %v1411 = vmul.f32 %v1379, %v1379
    %v1412 = vmul.f32 %v1380, %v1380
    %v1413 = vmul.f32 %v1381, %v1381
    %v1414 = vmul.f32 %v1382, %v1382
    %v1415 = vmul.f32 %v1383, %v1383
    %v1416 = vmul.f32 %v1384, %v1384
    %v1417 = vmul.f32 %v1385, %v1385
    %v1418 = vmul.f32 %v1386, %v1386
    %v1419 = vmul.f32 %v1387, %v1387
    %v1420 = vmul.f32 %v1388, %v1388
    %v1421 = vmul.f32 %v1389, %v1389
    %v1422 = vmul.f32 %v1390, %v1390
    %v1423 = vmul.f32 %v1391, %v1391
    %v1424 = vmul.f32 %v1392, %v1392
    %v1425 = vmul.f32 %v1393, %v1393
    %v1426 = vmul.f32 %v1394, %v1394
    %v1427 = vadd.f32 %v1395, %v1396
    %v1428 = vadd.f32 %v1427, %v1397
    %v1429 = vadd.f32 %v1428, %v1398
    %v1430 = vadd.f32 %v1429, %v1399
    %v1431 = vadd.f32 %v1430, %v1400
    %v1432 = vadd.f32 %v1431, %v1401
    %v1433 = vadd.f32 %v1432, %v1402
    %v1434 = vadd.f32 %v1433, %v1403
    %v1435 = vadd.f32 %v1434, %v1404
    %v1436 = vadd.f32 %v1435, %v1405
    %v1437 = vadd.f32 %v1436, %v1406
    %v1438 = vadd.f32 %v1437, %v1407
    %v1439 = vadd.f32 %v1438, %v1408
    %v1440 = vadd.f32 %v1439, %v1409
    %v1441 = vadd.f32 %v1440, %v1410
    %v1442 = vadd.f32 %v1441, %v1411
    %v1443 = vadd.f32 %v1442, %v1412
    %v1444 = vadd.f32 %v1443, %v1413
    %v1445 = vadd.f32 %v1444, %v1414
    %v1446 = vadd.f32 %v1445, %v1415
    %v1447 = vadd.f32 %v1446, %v1416
    %v1448 = vadd.f32 %v1447, %v1417
    %v1449 = vadd.f32 %v1448, %v1418
    %v1450 = vadd.f32 %v1449, %v1419
    %v1451 = vadd.f32 %v1450, %v1420
    %v1452 = vadd.f32 %v1451, %v1421
    %v1453 = vadd.f32 %v1452, %v1422
    %v1454 = vadd.f32 %v1453, %v1423
    %v1455 = vadd.f32 %v1454, %v1424
    %v1456 = vadd.f32 %v1455, %v1425
    %v1457 = vadd.f32 %v1456, %v1426
    %v1458 = vrot.slane %v1457, 4
    %v1459 = vadd.f32 %v1457, %v1458
    %v1460 = vrot.slane %v1459, 2
    %v1461 = vadd.f32 %v1459, %v1460
    %v1462 = vrot.slane %v1461, 1
    %v1463 = vadd.f32 %v1461, %v1462
    %v1464 = vmul.f32 %v1463, 0.00390625
    %v1465 = vadd.f32 %v1464, 1e-05
    %v1466 = vrsqrt.pop %v1465
    %v1467 = vmul.f32 %v1323, %v1466
    %v1469 = vlaneseq
    %v1470 = vshrl.u32 %v1469, 7
    %v1471 = vsub.s32 0, %v1470
    %v1472 = vrot.slane %v1467, %v1471
    %v1474 = vmul.f32 %v1363, %v1472
    %v1475 = vmul.f32 %v1364, %v1472
    %v1476 = vmul.f32 %v1365, %v1472
    %v1477 = vmul.f32 %v1366, %v1472
    %v1478 = vmul.f32 %v1367, %v1472
    %v1479 = vmul.f32 %v1368, %v1472
    %v1480 = vmul.f32 %v1369, %v1472
    %v1481 = vmul.f32 %v1370, %v1472
    %v1482 = vmul.f32 %v1371, %v1472
    %v1483 = vmul.f32 %v1372, %v1472
    %v1484 = vmul.f32 %v1373, %v1472
    %v1485 = vmul.f32 %v1374, %v1472
    %v1486 = vmul.f32 %v1375, %v1472
    %v1487 = vmul.f32 %v1376, %v1472
    %v1488 = vmul.f32 %v1377, %v1472
    %v1489 = vmul.f32 %v1378, %v1472
    %v1490 = vmul.f32 %v1379, %v1472
    %v1491 = vmul.f32 %v1380, %v1472
    %v1492 = vmul.f32 %v1381, %v1472
    %v1493 = vmul.f32 %v1382, %v1472
    %v1494 = vmul.f32 %v1383, %v1472
    %v1495 = vmul.f32 %v1384, %v1472
    %v1496 = vmul.f32 %v1385, %v1472
    %v1497 = vmul.f32 %v1386, %v1472
    %v1498 = vmul.f32 %v1387, %v1472
    %v1499 = vmul.f32 %v1388, %v1472
    %v1500 = vmul.f32 %v1389, %v1472
    %v1501 = vmul.f32 %v1390, %v1472
    %v1502 = vmul.f32 %v1391, %v1472
    %v1503 = vmul.f32 %v1392, %v1472
    %v1504 = vmul.f32 %v1393, %v1472
    %v1505 = vmul.f32 %v1394, %v1472
    %v1507 = vlaneseq
    %v1508 = vshrl.u32 %v1507, 7
    %v1509 = vsub.s32 0, %v1508
    %v1510 = vrot.slane %v1324, %v1509
    %v1512 = vadd.f32 %v1474, %v1510
    %v1513 = vadd.f32 %v1475, %v1510
    %v1514 = vadd.f32 %v1476, %v1510
    %v1515 = vadd.f32 %v1477, %v1510
    %v1516 = vadd.f32 %v1478, %v1510
    %v1517 = vadd.f32 %v1479, %v1510
    %v1518 = vadd.f32 %v1480, %v1510
    %v1519 = vadd.f32 %v1481, %v1510
    %v1520 = vadd.f32 %v1482, %v1510
    %v1521 = vadd.f32 %v1483, %v1510
    %v1522 = vadd.f32 %v1484, %v1510
    %v1523 = vadd.f32 %v1485, %v1510
    %v1524 = vadd.f32 %v1486, %v1510
    %v1525 = vadd.f32 %v1487, %v1510
    %v1526 = vadd.f32 %v1488, %v1510
    %v1527 = vadd.f32 %v1489, %v1510
    %v1528 = vadd.f32 %v1490, %v1510
    %v1529 = vadd.f32 %v1491, %v1510
    %v1530 = vadd.f32 %v1492, %v1510
    %v1531 = vadd.f32 %v1493, %v1510
    %v1532 = vadd.f32 %v1494, %v1510
    %v1533 = vadd.f32 %v1495, %v1510
    %v1534 = vadd.f32 %v1496, %v1510
    %v1535 = vadd.f32 %v1497, %v1510
    %v1536 = vadd.f32 %v1498, %v1510
    %v1537 = vadd.f32 %v1499, %v1510
    %v1538 = vadd.f32 %v1500, %v1510
    %v1539 = vadd.f32 %v1501, %v1510
    %v1540 = vadd.f32 %v1502, %v1510
    %v1541 = vadd.f32 %v1503, %v1510
    %v1542 = vadd.f32 %v1504, %v1510
    %v1543 = vadd.f32 %v1505, %v1510
    %v1544 = vmax.f32 %v1512, 0.0
    %v1545 = vmax.f32 %v1513, 0.0
    %v1546 = vmax.f32 %v1514, 0.0
    %v1547 = vmax.f32 %v1515, 0.0
    %v1548 = vmax.f32 %v1516, 0.0
    %v1549 = vmax.f32 %v1517, 0.0
    %v1550 = vmax.f32 %v1518, 0.0
    %v1551 = vmax.f32 %v1519, 0.0
    %v1552 = vmax.f32 %v1520, 0.0
    %v1553 = vmax.f32 %v1521, 0.0
    %v1554 = vmax.f32 %v1522, 0.0
    %v1555 = vmax.f32 %v1523, 0.0
    %v1556 = vmax.f32 %v1524, 0.0
    %v1557 = vmax.f32 %v1525, 0.0
    %v1558 = vmax.f32 %v1526, 0.0
    %v1559 = vmax.f32 %v1527, 0.0
    %v1560 = vmax.f32 %v1528, 0.0
    %v1561 = vmax.f32 %v1529, 0.0
    %v1562 = vmax.f32 %v1530, 0.0
    %v1563 = vmax.f32 %v1531, 0.0
    %v1564 = vmax.f32 %v1532, 0.0
    %v1565 = vmax.f32 %v1533, 0.0
    %v1566 = vmax.f32 %v1534, 0.0
    %v1567 = vmax.f32 %v1535, 0.0
    %v1568 = vmax.f32 %v1536, 0.0
    %v1569 = vmax.f32 %v1537, 0.0
    %v1570 = vmax.f32 %v1538, 0.0
    %v1571 = vmax.f32 %v1539, 0.0
    %v1572 = vmax.f32 %v1540, 0.0
    %v1573 = vmax.f32 %v1541, 0.0
    %v1574 = vmax.f32 %v1542, 0.0
    %v1575 = vmax.f32 %v1543, 0.0
    %s1576 = scalar_lea.vmem [#allocation2], 128
    %v1577 = vld [vmem:[%s1576] sm:$0xff]
    %v1578 = vld [vmem:[%s1576 + $0x8] sm:$0xff]
    %v1579 = vld [vmem:[%s1576 + $0x10] sm:$0xff]
    %v1580 = vld [vmem:[%s1576 + $0x18] sm:$0xff]
    %v1581 = vld [vmem:[%s1576 + $0x20] sm:$0xff]
    %v1582 = vld [vmem:[%s1576 + $0x28] sm:$0xff]
    %v1583 = vld [vmem:[%s1576 + $0x30] sm:$0xff]
    %v1584 = vld [vmem:[%s1576 + $0x38] sm:$0xff]
    %v1585 = vld [vmem:[%s1576 + $0x40] sm:$0xff]
    %v1586 = vld [vmem:[%s1576 + $0x48] sm:$0xff]
    %v1587 = vld [vmem:[%s1576 + $0x50] sm:$0xff]
    %v1588 = vld [vmem:[%s1576 + $0x58] sm:$0xff]
    %v1589 = vld [vmem:[%s1576 + $0x60] sm:$0xff]
    %v1590 = vld [vmem:[%s1576 + $0x68] sm:$0xff]
    %v1591 = vld [vmem:[%s1576 + $0x70] sm:$0xff]
    %v1592 = vld [vmem:[%s1576 + $0x78] sm:$0xff]
    %1593 = vmatprep.subr.mxu0 0.0
    %1594 = vmatpush1.msra.mxu0 %v1577
    %1595 = vmatprep.subr.mxu0 0.0
    %1596 = vmatpush1.msra.mxu0 %v1578
    %1597 = vmatprep.subr.mxu0 0.0
    %1598 = vmatpush1.msra.mxu0 %v1579
    %1599 = vmatprep.subr.mxu0 0.0
    %1600 = vmatpush1.msra.mxu0 %v1580
    %1601 = vmatprep.subr.mxu0 0.0
    %1602 = vmatpush1.msra.mxu0 %v1581
    %1603 = vmatprep.subr.mxu0 0.0
    %1604 = vmatpush1.msra.mxu0 %v1582
    %1605 = vmatprep.subr.mxu0 0.0
    %1606 = vmatpush1.msra.mxu0 %v1583
    %1607 = vmatprep.subr.mxu0 0.0
    %1608 = vmatpush1.msra.mxu0 %v1584
    %1609 = vmatprep.subr.mxu0 0.0
    %1610 = vmatpush1.msra.mxu0 %v1585
    %1611 = vmatprep.subr.mxu0 0.0
    %1612 = vmatpush1.msra.mxu0 %v1586
    %1613 = vmatprep.subr.mxu0 0.0
    %1614 = vmatpush1.msra.mxu0 %v1587
    %1615 = vmatprep.subr.mxu0 0.0
    %1616 = vmatpush1.msra.mxu0 %v1588
    %1617 = vmatprep.subr.mxu0 0.0
    %1618 = vmatpush1.msra.mxu0 %v1589
    %1619 = vmatprep.subr.mxu0 0.0
    %1620 = vmatpush1.msra.mxu0 %v1590
    %1621 = vmatprep.subr.mxu0 0.0
    %1622 = vmatpush1.msra.mxu0 %v1591
    %1623 = vmatprep.subr.mxu0 0.0
    %1624 = vmatpush1.msra.mxu0 %v1592
    %1625 = vmatprep.subr.mxu0 0.0
    %1626 = vmatpush1.msra.mxu0 0.0
    %1627 = vmatprep.subr.mxu0 0.0
    %1628 = vmatpush1.msra.mxu0 0.0
    %1629 = vmatprep.subr.mxu0 0.0
    %1630 = vmatpush1.msra.mxu0 0.0
    %1631 = vmatprep.subr.mxu0 0.0
    %1632 = vmatpush1.msra.mxu0 0.0
    %1633 = vmatprep.subr.mxu0 0.0
    %1634 = vmatpush1.msra.mxu0 0.0
    %1635 = vmatprep.subr.mxu0 0.0
    %1636 = vmatpush1.msra.mxu0 0.0
    %1637 = vmatprep.subr.mxu0 0.0
    %1638 = vmatpush1.msra.mxu0 0.0
    %1639 = vmatprep.subr.mxu0 0.0
    %1640 = vmatpush1.msra.mxu0 0.0
    %1641 = vmatprep.subr.mxu0 0.0
    %1642 = vmatpush1.msra.mxu0 0.0
    %1643 = vmatprep.subr.mxu0 0.0
    %1644 = vmatpush1.msra.mxu0 0.0
    %1645 = vmatprep.subr.mxu0 0.0
    %1646 = vmatpush1.msra.mxu0 0.0
    %1647 = vmatprep.subr.mxu0 0.0
    %1648 = vmatpush1.msra.mxu0 0.0
    %1649 = vmatprep.subr.mxu0 0.0
    %1650 = vmatpush1.msra.mxu0 0.0
    %1651 = vmatprep.subr.mxu0 0.0
    %1652 = vmatpush1.msra.mxu0 0.0
    %1653 = vmatprep.subr.mxu0 0.0
    %1654 = vmatpush1.msra.mxu0 0.0
    %1655 = vmatprep.subr.mxu0 0.0
    %1656 = vmatpush1.msra.mxu0 0.0
    %1657 = vmatprep.mubr.f32.mxu0 0.0
    %1658 = vmatmul.mubr.f32.gmra.mrb[0].mxu0 %v1544
    %v1659 = vpop.f32.mrb[0].mxu0
    %v1660 = vadd.f32 0.0, %v1659
    %v1661 = vpop.f32.mrb[0].mxu0
    %1662 = vmatprep.mubr.f32.mxu0 0.0
    %1663 = vmatmul.mubr.f32.gmra.mrb[0].mxu0 %v1545
    %v1664 = vpop.f32.mrb[0].mxu0
    %v1665 = vadd.f32 0.0, %v1664
    %v1666 = vpop.f32.mrb[0].mxu0
    %1667 = vmatprep.mubr.f32.mxu0 0.0
    %1668 = vmatmul.mubr.f32.gmra.mrb[0].mxu0 %v1546
    %v1669 = vpop.f32.mrb[0].mxu0
    %v1670 = vadd.f32 0.0, %v1669
    %v1671 = vpop.f32.mrb[0].mxu0
    %1672 = vmatprep.mubr.f32.mxu0 0.0
    %1673 = vmatmul.mubr.f32.gmra.mrb[0].mxu0 %v1547
    %v1674 = vpop.f32.mrb[0].mxu0
    %v1675 = vadd.f32 0.0, %v1674
    %v1676 = vpop.f32.mrb[0].mxu0
    %1677 = vmatprep.mubr.f32.mxu0 0.0
    %1678 = vmatmul.mubr.f32.gmra.mrb[0].mxu0 %v1548
    %v1679 = vpop.f32.mrb[0].mxu0
    %v1680 = vadd.f32 0.0, %v1679
    %v1681 = vpop.f32.mrb[0].mxu0
    %1682 = vmatprep.mubr.f32.mxu0 0.0
    %1683 = vmatmul.mubr.f32.gmra.mrb[0].mxu0 %v1549
    %v1684 = vpop.f32.mrb[0].mxu0
    %v1685 = vadd.f32 0.0, %v1684
    %v1686 = vpop.f32.mrb[0].mxu0
    %1687 = vmatprep.mubr.f32.mxu0 0.0
    %1688 = vmatmul.mubr.f32.gmra.mrb[0].mxu0 %v1550
    %v1689 = vpop.f32.mrb[0].mxu0
    %v1690 = vadd.f32 0.0, %v1689
    %v1691 = vpop.f32.mrb[0].mxu0
    %1692 = vmatprep.mubr.f32.mxu0 0.0
    %1693 = vmatmul.mubr.f32.gmra.mrb[0].mxu0 %v1551
    %v1694 = vpop.f32.mrb[0].mxu0
    %v1695 = vadd.f32 0.0, %v1694
    %v1696 = vpop.f32.mrb[0].mxu0
    %1697 = vmatprep.mubr.f32.mxu0 0.0
    %1698 = vmatmul.mubr.f32.gmra.mrb[0].mxu0 %v1552
    %v1699 = vpop.f32.mrb[0].mxu0
    %v1700 = vadd.f32 0.0, %v1699
    %v1701 = vpop.f32.mrb[0].mxu0
    %1702 = vmatprep.mubr.f32.mxu0 0.0
    %1703 = vmatmul.mubr.f32.gmra.mrb[0].mxu0 %v1553
    %v1704 = vpop.f32.mrb[0].mxu0
    %v1705 = vadd.f32 0.0, %v1704
    %v1706 = vpop.f32.mrb[0].mxu0
    %1707 = vmatprep.mubr.f32.mxu0 0.0
    %1708 = vmatmul.mubr.f32.gmra.mrb[0].mxu0 %v1554
    %v1709 = vpop.f32.mrb[0].mxu0
    %v1710 = vadd.f32 0.0, %v1709
    %v1711 = vpop.f32.mrb[0].mxu0
    %1712 = vmatprep.mubr.f32.mxu0 0.0
    %1713 = vmatmul.mubr.f32.gmra.mrb[0].mxu0 %v1555
    %v1714 = vpop.f32.mrb[0].mxu0
    %v1715 = vadd.f32 0.0, %v1714
    %v1716 = vpop.f32.mrb[0].mxu0
    %1717 = vmatprep.mubr.f32.mxu0 0.0
    %1718 = vmatmul.mubr.f32.gmra.mrb[0].mxu0 %v1556
    %v1719 = vpop.f32.mrb[0].mxu0
    %v1720 = vadd.f32 0.0, %v1719
    %v1721 = vpop.f32.mrb[0].mxu0
    %1722 = vmatprep.mubr.f32.mxu0 0.0
    %1723 = vmatmul.mubr.f32.gmra.mrb[0].mxu0 %v1557
    %v1724 = vpop.f32.mrb[0].mxu0
    %v1725 = vadd.f32 0.0, %v1724
    %v1726 = vpop.f32.mrb[0].mxu0
    %1727 = vmatprep.mubr.f32.mxu0 0.0
    %1728 = vmatmul.mubr.f32.gmra.mrb[0].mxu0 %v1558
    %v1729 = vpop.f32.mrb[0].mxu0
    %v1730 = vadd.f32 0.0, %v1729
    %v1731 = vpop.f32.mrb[0].mxu0
    %1732 = vmatprep.mubr.f32.mxu0 0.0
    %1733 = vmatmul.mubr.f32.gmra.mrb[0].mxu0 %v1559
    %v1734 = vpop.f32.mrb[0].mxu0
    %v1735 = vadd.f32 0.0, %v1734
    %v1736 = vpop.f32.mrb[0].mxu0
    %1737 = vmatprep.mubr.f32.mxu0 0.0
    %1738 = vmatmul.mubr.f32.gmra.mrb[0].mxu0 %v1560
    %v1739 = vpop.f32.mrb[0].mxu0
    %v1740 = vadd.f32 0.0, %v1739
    %v1741 = vpop.f32.mrb[0].mxu0
    %1742 = vmatprep.mubr.f32.mxu0 0.0
    %1743 = vmatmul.mubr.f32.gmra.mrb[0].mxu0 %v1561
    %v1744 = vpop.f32.mrb[0].mxu0
    %v1745 = vadd.f32 0.0, %v1744
    %v1746 = vpop.f32.mrb[0].mxu0
    %1747 = vmatprep.mubr.f32.mxu0 0.0
    %1748 = vmatmul.mubr.f32.gmra.mrb[0].mxu0 %v1562
    %v1749 = vpop.f32.mrb[0].mxu0
    %v1750 = vadd.f32 0.0, %v1749
    %v1751 = vpop.f32.mrb[0].mxu0
    %1752 = vmatprep.mubr.f32.mxu0 0.0
    %1753 = vmatmul.mubr.f32.gmra.mrb[0].mxu0 %v1563
    %v1754 = vpop.f32.mrb[0].mxu0
    %v1755 = vadd.f32 0.0, %v1754
    %v1756 = vpop.f32.mrb[0].mxu0
    %1757 = vmatprep.mubr.f32.mxu0 0.0
    %1758 = vmatmul.mubr.f32.gmra.mrb[0].mxu0 %v1564
    %v1759 = vpop.f32.mrb[0].mxu0
    %v1760 = vadd.f32 0.0, %v1759
    %v1761 = vpop.f32.mrb[0].mxu0
    %1762 = vmatprep.mubr.f32.mxu0 0.0
    %1763 = vmatmul.mubr.f32.gmra.mrb[0].mxu0 %v1565
    %v1764 = vpop.f32.mrb[0].mxu0
    %v1765 = vadd.f32 0.0, %v1764
    %v1766 = vpop.f32.mrb[0].mxu0
    %1767 = vmatprep.mubr.f32.mxu0 0.0
    %1768 = vmatmul.mubr.f32.gmra.mrb[0].mxu0 %v1566
    %v1769 = vpop.f32.mrb[0].mxu0
    %v1770 = vadd.f32 0.0, %v1769
    %v1771 = vpop.f32.mrb[0].mxu0
    %1772 = vmatprep.mubr.f32.mxu0 0.0
    %1773 = vmatmul.mubr.f32.gmra.mrb[0].mxu0 %v1567
    %v1774 = vpop.f32.mrb[0].mxu0
    %v1775 = vadd.f32 0.0, %v1774
    %v1776 = vpop.f32.mrb[0].mxu0
    %1777 = vmatprep.mubr.f32.mxu0 0.0
    %1778 = vmatmul.mubr.f32.gmra.mrb[0].mxu0 %v1568
    %v1779 = vpop.f32.mrb[0].mxu0
    %v1780 = vadd.f32 0.0, %v1779
    %v1781 = vpop.f32.mrb[0].mxu0
    %1782 = vmatprep.mubr.f32.mxu0 0.0
    %1783 = vmatmul.mubr.f32.gmra.mrb[0].mxu0 %v1569
    %v1784 = vpop.f32.mrb[0].mxu0
    %v1785 = vadd.f32 0.0, %v1784
    %v1786 = vpop.f32.mrb[0].mxu0
    %1787 = vmatprep.mubr.f32.mxu0 0.0
    %1788 = vmatmul.mubr.f32.gmra.mrb[0].mxu0 %v1570
    %v1789 = vpop.f32.mrb[0].mxu0
    %v1790 = vadd.f32 0.0, %v1789
    %v1791 = vpop.f32.mrb[0].mxu0
    %1792 = vmatprep.mubr.f32.mxu0 0.0
    %1793 = vmatmul.mubr.f32.gmra.mrb[0].mxu0 %v1571
    %v1794 = vpop.f32.mrb[0].mxu0
    %v1795 = vadd.f32 0.0, %v1794
    %v1796 = vpop.f32.mrb[0].mxu0
    %1797 = vmatprep.mubr.f32.mxu0 0.0
    %1798 = vmatmul.mubr.f32.gmra.mrb[0].mxu0 %v1572
    %v1799 = vpop.f32.mrb[0].mxu0
    %v1800 = vadd.f32 0.0, %v1799
    %v1801 = vpop.f32.mrb[0].mxu0
    %1802 = vmatprep.mubr.f32.mxu0 0.0
    %1803 = vmatmul.mubr.f32.gmra.mrb[0].mxu0 %v1573
    %v1804 = vpop.f32.mrb[0].mxu0
    %v1805 = vadd.f32 0.0, %v1804
    %v1806 = vpop.f32.mrb[0].mxu0
    %1807 = vmatprep.mubr.f32.mxu0 0.0
    %1808 = vmatmul.mubr.f32.gmra.mrb[0].mxu0 %v1574
    %v1809 = vpop.f32.mrb[0].mxu0
    %v1810 = vadd.f32 0.0, %v1809
    %v1811 = vpop.f32.mrb[0].mxu0
    %1812 = vmatprep.mubr.f32.mxu0 0.0
    %1813 = vmatmul.mubr.f32.gmra.mrb[0].mxu0 %v1575
    %v1814 = vpop.f32.mrb[0].mxu0
    %v1815 = vadd.f32 0.0, %v1814
    %v1816 = vpop.f32.mrb[0].mxu0
    %1817 = vdwg.mxu0
    %s1818 = scalar_lea.vmem %s9, 1
    %v1819 = vld [vmem:[%s1818] sm:$0x1]
    %s1820 = scalar_lea.vmem %s10, 1
    %v1821 = vld [vmem:[%s1820] sm:$0x1]
    %v1822 = vadd.f32 %v1660, %v1665
    %v1823 = vadd.f32 %v1822, %v1670
    %v1824 = vadd.f32 %v1823, %v1675
    %v1825 = vadd.f32 %v1824, %v1680
    %v1826 = vadd.f32 %v1825, %v1685
    %v1827 = vadd.f32 %v1826, %v1690
    %v1828 = vadd.f32 %v1827, %v1695
    %v1829 = vadd.f32 %v1828, %v1700
    %v1830 = vadd.f32 %v1829, %v1705
    %v1831 = vadd.f32 %v1830, %v1710
    %v1832 = vadd.f32 %v1831, %v1715
    %v1833 = vadd.f32 %v1832, %v1720
    %v1834 = vadd.f32 %v1833, %v1725
    %v1835 = vadd.f32 %v1834, %v1730
    %v1836 = vadd.f32 %v1835, %v1735
    %v1837 = vadd.f32 %v1836, %v1740
    %v1838 = vadd.f32 %v1837, %v1745
    %v1839 = vadd.f32 %v1838, %v1750
    %v1840 = vadd.f32 %v1839, %v1755
    %v1841 = vadd.f32 %v1840, %v1760
    %v1842 = vadd.f32 %v1841, %v1765
    %v1843 = vadd.f32 %v1842, %v1770
    %v1844 = vadd.f32 %v1843, %v1775
    %v1845 = vadd.f32 %v1844, %v1780
    %v1846 = vadd.f32 %v1845, %v1785
    %v1847 = vadd.f32 %v1846, %v1790
    %v1848 = vadd.f32 %v1847, %v1795
    %v1849 = vadd.f32 %v1848, %v1800
    %v1850 = vadd.f32 %v1849, %v1805
    %v1851 = vadd.f32 %v1850, %v1810
    %v1852 = vadd.f32 %v1851, %v1815
    %v1853 = vrot.slane %v1852, 4
    %v1854 = vadd.f32 %v1852, %v1853
    %v1855 = vrot.slane %v1854, 2
    %v1856 = vadd.f32 %v1854, %v1855
    %v1857 = vrot.slane %v1856, 1
    %v1858 = vadd.f32 %v1856, %v1857
    %v1859 = vmul.f32 %v1858, 0.00390625
    %v1860 = vsub.f32 %v1660, %v1859
    %v1861 = vsub.f32 %v1665, %v1859
    %v1862 = vsub.f32 %v1670, %v1859
    %v1863 = vsub.f32 %v1675, %v1859
    %v1864 = vsub.f32 %v1680, %v1859
    %v1865 = vsub.f32 %v1685, %v1859
    %v1866 = vsub.f32 %v1690, %v1859
    %v1867 = vsub.f32 %v1695, %v1859
    %v1868 = vsub.f32 %v1700, %v1859
    %v1869 = vsub.f32 %v1705, %v1859
    %v1870 = vsub.f32 %v1710, %v1859
    %v1871 = vsub.f32 %v1715, %v1859
    %v1872 = vsub.f32 %v1720, %v1859
    %v1873 = vsub.f32 %v1725, %v1859
    %v1874 = vsub.f32 %v1730, %v1859
    %v1875 = vsub.f32 %v1735, %v1859
    %v1876 = vsub.f32 %v1740, %v1859
    %v1877 = vsub.f32 %v1745, %v1859
    %v1878 = vsub.f32 %v1750, %v1859
    %v1879 = vsub.f32 %v1755, %v1859
    %v1880 = vsub.f32 %v1760, %v1859
    %v1881 = vsub.f32 %v1765, %v1859
    %v1882 = vsub.f32 %v1770, %v1859
    %v1883 = vsub.f32 %v1775, %v1859
    %v1884 = vsub.f32 %v1780, %v1859
    %v1885 = vsub.f32 %v1785, %v1859
    %v1886 = vsub.f32 %v1790, %v1859
    %v1887 = vsub.f32 %v1795, %v1859
    %v1888 = vsub.f32 %v1800, %v1859
    %v1889 = vsub.f32 %v1805, %v1859
    %v1890 = vsub.f32 %v1810, %v1859
    %v1891 = vsub.f32 %v1815, %v1859
    %v1892 = vmul.f32 %v1860, %v1860
    %v1893 = vmul.f32 %v1861, %v1861
    %v1894 = vmul.f32 %v1862, %v1862
    %v1895 = vmul.f32 %v1863, %v1863
    %v1896 = vmul.f32 %v1864, %v1864
    %v1897 = vmul.f32 %v1865, %v1865
    %v1898 = vmul.f32 %v1866, %v1866
    %v1899 = vmul.f32 %v1867, %v1867
    %v1900 = vmul.f32 %v1868, %v1868
    %v1901 = vmul.f32 %v1869, %v1869
    %v1902 = vmul.f32 %v1870, %v1870
    %v1903 = vmul.f32 %v1871, %v1871
    %v1904 = vmul.f32 %v1872, %v1872
    %v1905 = vmul.f32 %v1873, %v1873
    %v1906 = vmul.f32 %v1874, %v1874
    %v1907 = vmul.f32 %v1875, %v1875
    %v1908 = vmul.f32 %v1876, %v1876
    %v1909 = vmul.f32 %v1877, %v1877
    %v1910 = vmul.f32 %v1878, %v1878
    %v1911 = vmul.f32 %v1879, %v1879
    %v1912 = vmul.f32 %v1880, %v1880
    %v1913 = vmul.f32 %v1881, %v1881
    %v1914 = vmul.f32 %v1882, %v1882
    %v1915 = vmul.f32 %v1883, %v1883
    %v1916 = vmul.f32 %v1884, %v1884
    %v1917 = vmul.f32 %v1885, %v1885
    %v1918 = vmul.f32 %v1886, %v1886
    %v1919 = vmul.f32 %v1887, %v1887
    %v1920 = vmul.f32 %v1888, %v1888
    %v1921 = vmul.f32 %v1889, %v1889
    %v1922 = vmul.f32 %v1890, %v1890
    %v1923 = vmul.f32 %v1891, %v1891
    %v1924 = vadd.f32 %v1892, %v1893
    %v1925 = vadd.f32 %v1924, %v1894
    %v1926 = vadd.f32 %v1925, %v1895
    %v1927 = vadd.f32 %v1926, %v1896
    %v1928 = vadd.f32 %v1927, %v1897
    %v1929 = vadd.f32 %v1928, %v1898
    %v1930 = vadd.f32 %v1929, %v1899
    %v1931 = vadd.f32 %v1930, %v1900
    %v1932 = vadd.f32 %v1931, %v1901
    %v1933 = vadd.f32 %v1932, %v1902
    %v1934 = vadd.f32 %v1933, %v1903
    %v1935 = vadd.f32 %v1934, %v1904
    %v1936 = vadd.f32 %v1935, %v1905
    %v1937 = vadd.f32 %v1936, %v1906
    %v1938 = vadd.f32 %v1937, %v1907
    %v1939 = vadd.f32 %v1938, %v1908
    %v1940 = vadd.f32 %v1939, %v1909
    %v1941 = vadd.f32 %v1940, %v1910
    %v1942 = vadd.f32 %v1941, %v1911
    %v1943 = vadd.f32 %v1942, %v1912
    %v1944 = vadd.f32 %v1943, %v1913
    %v1945 = vadd.f32 %v1944, %v1914
    %v1946 = vadd.f32 %v1945, %v1915
    %v1947 = vadd.f32 %v1946, %v1916
    %v1948 = vadd.f32 %v1947, %v1917
    %v1949 = vadd.f32 %v1948, %v1918
    %v1950 = vadd.f32 %v1949, %v1919
    %v1951 = vadd.f32 %v1950, %v1920
    %v1952 = vadd.f32 %v1951, %v1921
    %v1953 = vadd.f32 %v1952, %v1922
    %v1954 = vadd.f32 %v1953, %v1923
    %v1955 = vrot.slane %v1954, 4
    %v1956 = vadd.f32 %v1954, %v1955
    %v1957 = vrot.slane %v1956, 2
    %v1958 = vadd.f32 %v1956, %v1957
    %v1959 = vrot.slane %v1958, 1
    %v1960 = vadd.f32 %v1958, %v1959
    %v1961 = vmul.f32 %v1960, 0.00390625
    %v1962 = vadd.f32 %v1961, 1e-05
    %v1963 = vrsqrt.pop %v1962
    %v1964 = vmul.f32 %v1819, %v1963
    %v1966 = vlaneseq
    %v1967 = vshrl.u32 %v1966, 7
    %v1968 = vsub.s32 0, %v1967
    %v1969 = vrot.slane %v1964, %v1968
    %v1971 = vmul.f32 %v1860, %v1969
    %v1972 = vmul.f32 %v1861, %v1969
    %v1973 = vmul.f32 %v1862, %v1969
    %v1974 = vmul.f32 %v1863, %v1969
    %v1975 = vmul.f32 %v1864, %v1969
    %v1976 = vmul.f32 %v1865, %v1969
    %v1977 = vmul.f32 %v1866, %v1969
    %v1978 = vmul.f32 %v1867, %v1969
    %v1979 = vmul.f32 %v1868, %v1969
    %v1980 = vmul.f32 %v1869, %v1969
    %v1981 = vmul.f32 %v1870, %v1969
    %v1982 = vmul.f32 %v1871, %v1969
    %v1983 = vmul.f32 %v1872, %v1969
    %v1984 = vmul.f32 %v1873, %v1969
    %v1985 = vmul.f32 %v1874, %v1969
    %v1986 = vmul.f32 %v1875, %v1969
    %v1987 = vmul.f32 %v1876, %v1969
    %v1988 = vmul.f32 %v1877, %v1969
    %v1989 = vmul.f32 %v1878, %v1969
    %v1990 = vmul.f32 %v1879, %v1969
    %v1991 = vmul.f32 %v1880, %v1969
    %v1992 = vmul.f32 %v1881, %v1969
    %v1993 = vmul.f32 %v1882, %v1969
    %v1994 = vmul.f32 %v1883, %v1969
    %v1995 = vmul.f32 %v1884, %v1969
    %v1996 = vmul.f32 %v1885, %v1969
    %v1997 = vmul.f32 %v1886, %v1969
    %v1998 = vmul.f32 %v1887, %v1969
    %v1999 = vmul.f32 %v1888, %v1969
    %v2000 = vmul.f32 %v1889, %v1969
    %v2001 = vmul.f32 %v1890, %v1969
    %v2002 = vmul.f32 %v1891, %v1969
    %v2004 = vlaneseq
    %v2005 = vshrl.u32 %v2004, 7
    %v2006 = vsub.s32 0, %v2005
    %v2007 = vrot.slane %v1821, %v2006
    %v2009 = vadd.f32 %v1971, %v2007
    %v2010 = vadd.f32 %v1972, %v2007
    %v2011 = vadd.f32 %v1973, %v2007
    %v2012 = vadd.f32 %v1974, %v2007
    %v2013 = vadd.f32 %v1975, %v2007
    %v2014 = vadd.f32 %v1976, %v2007
    %v2015 = vadd.f32 %v1977, %v2007
    %v2016 = vadd.f32 %v1978, %v2007
    %v2017 = vadd.f32 %v1979, %v2007
    %v2018 = vadd.f32 %v1980, %v2007
    %v2019 = vadd.f32 %v1981, %v2007
    %v2020 = vadd.f32 %v1982, %v2007
    %v2021 = vadd.f32 %v1983, %v2007
    %v2022 = vadd.f32 %v1984, %v2007
    %v2023 = vadd.f32 %v1985, %v2007
    %v2024 = vadd.f32 %v1986, %v2007
    %v2025 = vadd.f32 %v1987, %v2007
    %v2026 = vadd.f32 %v1988, %v2007
    %v2027 = vadd.f32 %v1989, %v2007
    %v2028 = vadd.f32 %v1990, %v2007
    %v2029 = vadd.f32 %v1991, %v2007
    %v2030 = vadd.f32 %v1992, %v2007
    %v2031 = vadd.f32 %v1993, %v2007
    %v2032 = vadd.f32 %v1994, %v2007
    %v2033 = vadd.f32 %v1995, %v2007
    %v2034 = vadd.f32 %v1996, %v2007
    %v2035 = vadd.f32 %v1997, %v2007
    %v2036 = vadd.f32 %v1998, %v2007
    %v2037 = vadd.f32 %v1999, %v2007
    %v2038 = vadd.f32 %v2000, %v2007
    %v2039 = vadd.f32 %v2001, %v2007
    %v2040 = vadd.f32 %v2002, %v2007
    %v2041 = vmax.f32 %v2009, 0.0
    %v2042 = vmax.f32 %v2010, 0.0
    %v2043 = vmax.f32 %v2011, 0.0
    %v2044 = vmax.f32 %v2012, 0.0
    %v2045 = vmax.f32 %v2013, 0.0
    %v2046 = vmax.f32 %v2014, 0.0
    %v2047 = vmax.f32 %v2015, 0.0
    %v2048 = vmax.f32 %v2016, 0.0
    %v2049 = vmax.f32 %v2017, 0.0
    %v2050 = vmax.f32 %v2018, 0.0
    %v2051 = vmax.f32 %v2019, 0.0
    %v2052 = vmax.f32 %v2020, 0.0
    %v2053 = vmax.f32 %v2021, 0.0
    %v2054 = vmax.f32 %v2022, 0.0
    %v2055 = vmax.f32 %v2023, 0.0
    %v2056 = vmax.f32 %v2024, 0.0
    %v2057 = vmax.f32 %v2025, 0.0
    %v2058 = vmax.f32 %v2026, 0.0
    %v2059 = vmax.f32 %v2027, 0.0
    %v2060 = vmax.f32 %v2028, 0.0
    %v2061 = vmax.f32 %v2029, 0.0
    %v2062 = vmax.f32 %v2030, 0.0
    %v2063 = vmax.f32 %v2031, 0.0
    %v2064 = vmax.f32 %v2032, 0.0
    %v2065 = vmax.f32 %v2033, 0.0
    %v2066 = vmax.f32 %v2034, 0.0
    %v2067 = vmax.f32 %v2035, 0.0
    %v2068 = vmax.f32 %v2036, 0.0
    %v2069 = vmax.f32 %v2037, 0.0
    %v2070 = vmax.f32 %v2038, 0.0
    %v2071 = vmax.f32 %v2039, 0.0
    %v2072 = vmax.f32 %v2040, 0.0
    %v2073 = vld [vmem:[%s11] sm:$0xff]
    %v2074 = vld [vmem:[%s11 + $0x8] sm:$0xf]
    %v2075 = vld [vmem:[%s12] sm:$0xff]
    %v2076 = vld [vmem:[%s12 + $0x8] sm:$0xf]
    %2078 = vset.pattern.permute.xlu0 0
    %2079 = vperm.xlu0 %2078, %v2075
    %v2080 = vpop.permute.xlu0 %2079
    %2083 = vset.pattern.permute.xlu0 0
    %2084 = vperm.xlu0 %2083, %v2076
    %v2085 = vpop.permute.xlu0 %2084
    %2087 = vmatprep.subr.mxu0 0.0
    %2088 = vmatpush1.xpose.msra.mxu0 %v2041
    %2089 = vmatprep.subr.mxu0 0.0
    %2090 = vmatpush1.xpose.msra.mxu0 %v2042
    %2091 = vmatprep.subr.mxu0 0.0
    %2092 = vmatpush1.xpose.msra.mxu0 %v2043
    %2093 = vmatprep.subr.mxu0 0.0
    %2094 = vmatpush1.xpose.msra.mxu0 %v2044
    %2095 = vmatprep.subr.mxu0 0.0
    %2096 = vmatpush1.xpose.msra.mxu0 %v2045
    %2097 = vmatprep.subr.mxu0 0.0
    %2098 = vmatpush1.xpose.msra.mxu0 %v2046
    %2099 = vmatprep.subr.mxu0 0.0
    %2100 = vmatpush1.xpose.msra.mxu0 %v2047
    %2101 = vmatprep.subr.mxu0 0.0
    %2102 = vmatpush1.xpose.msra.mxu0 %v2048
    %2103 = vmatprep.subr.mxu0 0.0
    %2104 = vmatpush1.xpose.msra.mxu0 %v2049
    %2105 = vmatprep.subr.mxu0 0.0
    %2106 = vmatpush1.xpose.msra.mxu0 %v2050
    %2107 = vmatprep.subr.mxu0 0.0
    %2108 = vmatpush1.xpose.msra.mxu0 %v2051
    %2109 = vmatprep.subr.mxu0 0.0
    %2110 = vmatpush1.xpose.msra.mxu0 %v2052
    %2111 = vmatprep.subr.mxu0 0.0
    %2112 = vmatpush1.xpose.msra.mxu0 %v2053
    %2113 = vmatprep.subr.mxu0 0.0
    %2114 = vmatpush1.xpose.msra.mxu0 %v2054
    %2115 = vmatprep.subr.mxu0 0.0
    %2116 = vmatpush1.xpose.msra.mxu0 %v2055
    %2117 = vmatprep.subr.mxu0 0.0
    %2118 = vmatpush1.xpose.msra.mxu0 %v2056
    %2119 = vmatprep.subr.mxu0 0.0
    %2120 = vmatpush1.xpose.msra.mxu0 %v2057
    %2121 = vmatprep.subr.mxu0 0.0
    %2122 = vmatpush1.xpose.msra.mxu0 %v2058
    %2123 = vmatprep.subr.mxu0 0.0
    %2124 = vmatpush1.xpose.msra.mxu0 %v2059
    %2125 = vmatprep.subr.mxu0 0.0
    %2126 = vmatpush1.xpose.msra.mxu0 %v2060
    %2127 = vmatprep.subr.mxu0 0.0
    %2128 = vmatpush1.xpose.msra.mxu0 %v2061
    %2129 = vmatprep.subr.mxu0 0.0
    %2130 = vmatpush1.xpose.msra.mxu0 %v2062
    %2131 = vmatprep.subr.mxu0 0.0
    %2132 = vmatpush1.xpose.msra.mxu0 %v2063
    %2133 = vmatprep.subr.mxu0 0.0
    %2134 = vmatpush1.xpose.msra.mxu0 %v2064
    %2135 = vmatprep.subr.mxu0 0.0
    %2136 = vmatpush1.xpose.msra.mxu0 %v2065
    %2137 = vmatprep.subr.mxu0 0.0
    %2138 = vmatpush1.xpose.msra.mxu0 %v2066
    %2139 = vmatprep.subr.mxu0 0.0
    %2140 = vmatpush1.xpose.msra.mxu0 %v2067
    %2141 = vmatprep.subr.mxu0 0.0
    %2142 = vmatpush1.xpose.msra.mxu0 %v2068
    %2143 = vmatprep.subr.mxu0 0.0
    %2144 = vmatpush1.xpose.msra.mxu0 %v2069
    %2145 = vmatprep.subr.mxu0 0.0
    %2146 = vmatpush1.xpose.msra.mxu0 %v2070
    %2147 = vmatprep.subr.mxu0 0.0
    %2148 = vmatpush1.xpose.msra.mxu0 %v2071
    %2149 = vmatprep.subr.mxu0 0.0
    %2150 = vmatpush1.xpose.msra.mxu0 %v2072
    %2151 = vmatprep.mubr.f32.mxu0 0.0
    %2152 = vmatmul.mubr.f32.gmra.mrb[0].mxu0 %v2073
    %v2153 = vpop.f32.mrb[0].mxu0
    %v2154 = vadd.f32 %v2080, %v2153
    %v2155 = vpop.f32.mrb[0].mxu0
    %v2156 = vadd.f32 %v2080, %v2155
    %2157 = vmatprep.mubr.f32.mxu0 0.0
    %2158 = vmatmul.mubr.f32.gmra.mrb[0].mxu0 %v2074
    %v2159 = vpop.f32.mrb[0].mxu0
    %v2160 = vadd.f32 %v2085, %v2159
    %v2161 = vpop.f32.mrb[0].mxu0
    %v2162 = vadd.f32 %v2085, %v2161
    %2163 = vdwg.mxu0
    %2164 = vst [vmem:[%s13] sm:$0xff] %v2154
    %2165 = vst [vmem:[%s13 + $0x8] sm:$0xf] %v2160
    %s2166 = scalar_lea.vmem %s13, 16
    %2167 = vst [vmem:[%s2166] sm:$0xff] %v2156
    %2168 = vst [vmem:[%s2166 + $0x8] sm:$0xf] %v2162
    // Predicated region
    $region58: #{tpu_custom_call.1} parent=1 // pred_check
      _
    $region59: #{tpu_custom_call.1} parent=1 // pred_check_branch
      %2170 = sbr.rel (0) target = $region61
    $region60: #{tpu_custom_call.1} parent=1 // pred_region
      _
    $region61: #{tpu_custom_call.1} parent=1 // pred_fallthru
      _
    // Predicated region
    $region62: #{tpu_custom_call.1} parent=1 // pred_check
      _
    $region63: #{tpu_custom_call.1} parent=1 // pred_check_branch
      %2172 = sbr.rel (0) target = $region65
    $region64: #{tpu_custom_call.1} parent=1 // pred_region
      _
    $region65: #{tpu_custom_call.1} parent=1 // pred_fallthru
      _
    %2173 = vsyncpa [#allocation3], 1

</llo_original>
